<compile_context>
chip_gen: v6e
topology: v6e:2x2x1
jax: 0.10.0
libtpu: 0.0.40
codegen_flags: <defaults>
</compile_context>

<pallas_src>
import functools

import numpy as np

import jax
import jax.numpy as jnp
from jax import lax
from jax.experimental import pallas as pl
from jax.experimental.pallas import tpu as pltpu

VMEM_SPEC = pl.BlockSpec(memory_space=pltpu.MemorySpace.VMEM)
SMEM_SPEC = pl.BlockSpec(memory_space=pltpu.MemorySpace.SMEM)


def _round8(n):
    return (n + 7) // 8 * 8


# ---------------------------------------------------------------------------
# Static layout of the two packed slabs (shared by host packing and kernel)
# ---------------------------------------------------------------------------
def make_layout(alphabet_size, layers, heads, d_model, d_ffnn, seq_len):
    D, F, A, S, H, L = d_model, d_ffnn, alphabet_size, seq_len, heads, layers
    lay = dict(A=A, D=D, F=F, S=S, H=H, L=L)
    r = 0
    lay["emb"] = r;        r += _round8(A)          # embedding rows (lanes 0:D)
    lay["mask_full"] = r;  r += _round8(H * S)      # block-diag head mask (H*S, D)
    lay["mask_last"] = r;  r += _round8(H)          # last-row head mask (H, D)
    lay["head"] = r;       r += 8                   # w_out in lanes 0:D, b_out at lane D
    lay["vec"] = r                                  # per-layer bias/LN vectors
    lay["vec_stride"] = 8 * 8                       # 8 vectors x 8 replicated sublanes
    r += L * lay["vec_stride"]
    lay["v_rows"] = r                               # f32 slab rows
    lay["w_rows"] = 3 * D + 128                     # bf16 slab rows per layer
    return lay


# ---------------------------------------------------------------------------
# Fused Pallas kernel: whole model forward in one invocation
# ---------------------------------------------------------------------------
def fused_model_kernel(tok_ref, w_ref, v_ref, z_ref, x_ref, *, layout, eps):
    D, S, H, L = (layout[k] for k in ("D", "S", "H", "L"))
    bf16, f32 = jnp.bfloat16, jnp.float32

    # ---- embedding gather: S scalar-indexed row loads (token ids in SMEM) ----
    for i in range(S):
        x_ref[pl.ds(i, 1), :] = v_ref[pl.ds(layout["emb"] + tok_ref[i], 1), :]
    x = x_ref[...][:, 0:D]                                            # (S, D) f32

    # block-diagonal head masks (precomputed on host, reused by every layer)
    mask_full = v_ref[layout["mask_full"]:layout["mask_full"] + H * S, 0:D]  # (H*S, D)
    mask_last = v_ref[layout["mask_last"]:layout["mask_last"] + H, 0:D]      # (H, D)

    def vec128(l, idx, rows=8):     # pre-broadcast bias rows, 128-lane zero-padded
        base = layout["vec"] + l * layout["vec_stride"] + 8 * idx
        return v_ref[base:base + rows, :]

    def vecD(l, idx, rows=8):
        base = layout["vec"] + l * layout["vec_stride"] + 8 * idx
        return v_ref[base:base + rows, 0:D]

    def weights(l):                 # bf16, lane-padded to 128 (zero tails)
        return (w_ref[l, 0:D, :],                  # Wqkv  (D, 128)
                w_ref[l, D:2 * D, :],              # Wo    (D, 128)
                w_ref[l, 2 * D:3 * D, :],          # W1    (D, 128)
                w_ref[l, 3 * D:3 * D + 128, :])    # W2    (128, 128)

    def layer_norm(h, g, b):        # f32, biased variance (PyTorch LayerNorm)
        mu = jnp.mean(h, axis=-1, keepdims=True)
        var = jnp.mean((h - mu) ** 2, axis=-1, keepdims=True)
        return (h - mu) * lax.rsqrt(var + eps) * g + b

    def softmax_rows(s):            # exact divide (matches torch numerics)
        p = jnp.exp(s - jnp.max(s, axis=-1, keepdims=True))
        return p / jnp.sum(p, axis=-1, keepdims=True)

    # ------------------- full layers: all S rows kept -------------------
    for l in range(L - 1):
        wqkv, wo, w1, w2 = weights(l)
        qkv = jnp.dot(x.astype(bf16), wqkv, preferred_element_type=f32) + vec128(l, 0)
        q, k, v = qkv[:, 0:D], qkv[:, D:2 * D], qkv[:, 2 * D:3 * D]   # q pre-scaled

        # all heads at once: block-diagonal Q against shared K
        qbd = jnp.tile(q, (H, 1)) * mask_full                          # (H*S, D)
        s = lax.dot_general(qbd.astype(bf16), k.astype(bf16),
                            (((1,), (1,)), ((), ())), preferred_element_type=f32)
        p = softmax_rows(s)                                            # (H*S, S)
        pv = jnp.dot(p.astype(bf16), v.astype(bf16), preferred_element_type=f32)
        ctx = jnp.sum((pv * mask_full).reshape(H, S, D), axis=0)       # (S, D)
        attn = jnp.dot(ctx.astype(bf16), wo,
                       preferred_element_type=f32)[:, 0:D] + vecD(l, 1)

        h1 = layer_norm(x + attn, vecD(l, 2), vecD(l, 3))

        f = jnp.dot(h1.astype(bf16), w1, preferred_element_type=f32) + vec128(l, 4)
        f = jnp.maximum(f, 0.0)
        f = jnp.dot(f.astype(bf16), w2,
                    preferred_element_type=f32)[:, 0:D] + vecD(l, 5)

        x = layer_norm(h1 + f, vecD(l, 6), vecD(l, 7))

    # ---------- last layer: only row S-1 feeds the output head ----------
    l = L - 1
    wqkv, wo, w1, w2 = weights(l)
    qkv = jnp.dot(x.astype(bf16), wqkv, preferred_element_type=f32) + vec128(l, 0)
    k, v = qkv[:, D:2 * D], qkv[:, 2 * D:3 * D]                        # all rows
    q_last = qkv[S - 1:S, 0:D]                                         # (1, D)

    qbd = q_last * mask_last                                           # (H, D)
    s = lax.dot_general(qbd.astype(bf16), k.astype(bf16),
                        (((1,), (1,)), ((), ())), preferred_element_type=f32)
    p = softmax_rows(s)                                                # (H, S)
    pv = jnp.dot(p.astype(bf16), v.astype(bf16), preferred_element_type=f32)
    ctx = jnp.sum(pv * mask_last, axis=0, keepdims=True)               # (1, D)
    attn = jnp.dot(ctx.astype(bf16), wo,
                   preferred_element_type=f32)[:, 0:D] + vecD(l, 1, rows=1)

    h1 = layer_norm(x[S - 1:S, :] + attn, vecD(l, 2, 1), vecD(l, 3, 1))

    f = jnp.dot(h1.astype(bf16), w1, preferred_element_type=f32) + vec128(l, 4, 1)
    f = jnp.maximum(f, 0.0)
    f = jnp.dot(f.astype(bf16), w2,
                preferred_element_type=f32)[:, 0:D] + vecD(l, 5, 1)

    y = layer_norm(h1 + f, vecD(l, 6, 1), vecD(l, 7, 1))               # (1, D)

    # ---- output head epilogue: z = y @ W_out^T + b_out (kept in f32) ----
    w_out = v_ref[layout["head"]:layout["head"] + 1, 0:D]
    b_out = v_ref[layout["head"]:layout["head"] + 1, D:D + 1]
    z_ref[...] = (jnp.sum(y * w_out, axis=-1, keepdims=True) + b_out).astype(z_ref.dtype)


# ---------------------------------------------------------------------------
# Wrapper: one pallas_call, 3 input DMAs (tokens->SMEM + two slabs), no grid
# ---------------------------------------------------------------------------
def model_forward(w_tokens, w_slab, v_slab, *, layout, eps):
    kernel = functools.partial(fused_model_kernel, layout=layout, eps=eps)
    z = pl.pallas_call(
        kernel,
        out_shape=jax.ShapeDtypeStruct((1, 1), jnp.float32),
        in_specs=[SMEM_SPEC, VMEM_SPEC, VMEM_SPEC],
        out_specs=VMEM_SPEC,
        scratch_shapes=[pltpu.VMEM((layout["S"], 128), jnp.float32)],
    )(w_tokens.astype(jnp.int32), w_slab, v_slab)
    return z.reshape(1)


# ---------------------------------------------------------------------------
# Host-side packing into the two slabs
# ---------------------------------------------------------------------------
def pack_params(params, lay):
    A, D, F, S, H, L = (lay[k] for k in ("A", "D", "F", "S", "H", "L"))
    dh = D // H
    scale = 1.0 / (dh ** 0.5)

    # --- bf16 weight slab: all matmul operands, lane-padded to 128 ---
    w = np.zeros((L, lay["w_rows"], 128), np.float32)
    for l, p in enumerate(params["layers"]):
        wqkv_t = np.concatenate([np.asarray(p["wq"]).T * scale,    # fold 1/sqrt(dh)
                                 np.asarray(p["wk"]).T,
                                 np.asarray(p["wv"]).T], axis=1)   # (D, 3D)
        w[l, 0:D, 0:3 * D] = wqkv_t
        w[l, D:2 * D, 0:D] = np.asarray(p["wo"]).T
        w[l, 2 * D:3 * D, 0:F] = np.asarray(p["w1"]).T
        w[l, 3 * D:3 * D + F, 0:D] = np.asarray(p["w2"]).T         # rows F..128 stay 0
    w_slab = jnp.asarray(w, dtype=jnp.bfloat16)

    # --- f32 slab: embedding + masks + output head + pre-broadcast vectors ---
    v = np.zeros((lay["v_rows"], 128), np.float32)
    v[lay["emb"]:lay["emb"] + A, 0:D] = np.asarray(params["embedding"])
    cols = np.arange(D)[None, :] // dh
    rows = np.arange(H * S)[:, None] // S
    v[lay["mask_full"]:lay["mask_full"] + H * S, 0:D] = (rows == cols).astype(np.float32)
    v[lay["mask_last"]:lay["mask_last"] + H, 0:D] = \
        (np.arange(H)[:, None] == cols).astype(np.float32)
    v[lay["head"], 0:D] = np.asarray(params["w_out"]).reshape(-1)
    v[lay["head"], D] = float(np.asarray(params["b_out"]).reshape(-1)[0])
    for l, p in enumerate(params["layers"]):
        base = lay["vec"] + l * lay["vec_stride"]

        def put(idx, vec):
            vec = np.asarray(vec).reshape(1, -1)
            v[base + 8 * idx:base + 8 * idx + 8, 0:vec.shape[1]] = \
                np.broadcast_to(vec, (8, vec.shape[1]))

        put(0, np.concatenate([np.asarray(p["bq"]).reshape(-1) * scale,
                               np.asarray(p["bk"]).reshape(-1),
                               np.asarray(p["bv"]).reshape(-1)]))
        put(1, p["bo"]);  put(2, p["g1"]);  put(3, p["beta1"])
        put(4, p["bf1"]); put(5, p["bf2"]); put(6, p["g2"]); put(7, p["beta2"])
    v_slab = jnp.asarray(v)
    return w_slab, v_slab


# ---------------------------------------------------------------------------
# Deterministic parameter init (logical / PyTorch-layout params)
# ---------------------------------------------------------------------------
def init_params(key, alphabet_size, layers, heads, d_model, d_ffnn):
    def normal(k, shape, scale=0.05):
        return (scale * jax.random.normal(k, shape)).astype(jnp.float32)

    keys = jax.random.split(key, 2 + layers * 6)
    params = {
        "embedding": normal(keys[0], (alphabet_size, d_model)),
        "w_out": normal(keys[1], (1, d_model)),
        "b_out": jnp.zeros((1,), jnp.float32),
        "layers": [],
    }
    for l in range(layers):
        lk = jax.random.split(keys[2 + l], 6)
        params["layers"].append({
            "wq": normal(lk[0], (d_model, d_model)),
            "bq": jnp.zeros((1, d_model), jnp.float32),
            "wk": normal(lk[1], (d_model, d_model)),
            "bk": jnp.zeros((1, d_model), jnp.float32),
            "wv": normal(lk[2], (d_model, d_model)),
            "bv": jnp.zeros((1, d_model), jnp.float32),
            "wo": normal(lk[3], (d_model, d_model)),
            "bo": jnp.zeros((1, d_model), jnp.float32),
            "g1": jnp.ones((1, d_model), jnp.float32),
            "beta1": jnp.zeros((1, d_model), jnp.float32),
            "w1": normal(lk[4], (d_ffnn, d_model)),
            "bf1": jnp.zeros((1, d_ffnn), jnp.float32),
            "w2": normal(lk[5], (d_model, d_ffnn)),
            "bf2": jnp.zeros((1, d_model), jnp.float32),
            "g2": jnp.ones((1, d_model), jnp.float32),
            "beta2": jnp.zeros((1, d_model), jnp.float32),
        })
    return params


# ---------------------------------------------------------------------------
# Pure-JAX f32 reference (same math as the PyTorch module) for a sanity check
# ---------------------------------------------------------------------------
def reference_forward(w_tokens, params, *, heads, eps):
    x = params["embedding"][w_tokens]
    S, D = x.shape
    dh = D // heads
    for p in params["layers"]:
        q = x @ p["wq"].T + p["bq"]
        k = x @ p["wk"].T + p["bk"]
        v = x @ p["wv"].T + p["bv"]
        outs = []
        for h in range(heads):
            qh = q[:, h * dh:(h + 1) * dh] / (dh ** 0.5)
            kh = k[:, h * dh:(h + 1) * dh]
            vh = v[:, h * dh:(h + 1) * dh]
            s = qh @ kh.T
            pmat = jax.nn.softmax(s, axis=-1)
            outs.append(pmat @ vh)
        attn = jnp.concatenate(outs, axis=-1) @ p["wo"].T + p["bo"]
        h1 = x + attn
        mu = h1.mean(-1, keepdims=True)
        var = ((h1 - mu) ** 2).mean(-1, keepdims=True)
        h1 = (h1 - mu) / jnp.sqrt(var + eps) * p["g1"] + p["beta1"]
        f = jnp.maximum(h1 @ p["w1"].T + p["bf1"], 0.0) @ p["w2"].T + p["bf2"]
        h2 = h1 + f
        mu2 = h2.mean(-1, keepdims=True)
        var2 = ((h2 - mu2) ** 2).mean(-1, keepdims=True)
        x = (h2 - mu2) / jnp.sqrt(var2 + eps) * p["g2"] + p["beta2"]
    return (x[-1] @ params["w_out"][0]) + params["b_out"]


# ---------------------------------------------------------------------------
if __name__ == "__main__":
    ALPHABET, LAYERS, HEADS, D_MODEL, D_FFNN, SEQ = 10, 2, 4, 32, 64, 8
    EPS = 1e-5

    key = jax.random.PRNGKey(0)
    pkey, dkey = jax.random.split(key)
    params = init_params(pkey, ALPHABET, LAYERS, HEADS, D_MODEL, D_FFNN)
    layout = make_layout(ALPHABET, LAYERS, HEADS, D_MODEL, D_FFNN, SEQ)
    w_slab, v_slab = pack_params(params, layout)

    # input: 1-D sequence of token ids (the PyTorch forward's `w`)
    w_tokens = jax.random.randint(dkey, (SEQ,), 0, ALPHABET)

    z = model_forward(w_tokens, w_slab, v_slab, layout=layout, eps=EPS)
    z = jax.block_until_ready(z)

    z_ref = reference_forward(w_tokens, params, heads=HEADS, eps=EPS)
    assert z.shape == (1,)
    # tolerance covers bf16 MXU operands (f32 accumulation); LN/softmax stay f32
    assert jnp.allclose(z, z_ref, atol=5e-3, rtol=5e-3), (z, z_ref)

    print("KERNEL_OK")
</pallas_src>

<mosaic_0001>
module attributes {stable_mosaic.version = 11 : i64} {
  func.func @fused_model_kernel(%arg0: memref<8xi32, #tpu.memory_space<smem>>, %arg1: memref<2x224x128xbf16, #tpu.memory_space<vmem>>, %arg2: memref<192x128xf32, #tpu.memory_space<vmem>>, %arg3: memref<1x1xf32, #tpu.memory_space<vmem>>, %arg4: memref<8x128xf32, #tpu.memory_space<vmem>>) attributes {dimension_semantics = [], scalar_prefetch = 0 : i64, scratch_operands = 1 : i64, tpu.core_type = #tpu.core_type<tc>} {
    %c0 = arith.constant 0 : index
    %0 = memref.load %arg0[%c0] : memref<8xi32, #tpu.memory_space<smem>>
    %c0_i32 = arith.constant 0 : i32
    %1 = arith.addi %c0_i32, %0 : i32
    %2 = arith.index_cast %1 : i32 to index
    %c0_0 = arith.constant 0 : index
    %3 = vector.load %arg2[%2, %c0_0] : memref<192x128xf32, #tpu.memory_space<vmem>>, vector<1x128xf32>
    %c0_1 = arith.constant 0 : index
    %c0_2 = arith.constant 0 : index
    %4 = vector.load %arg4[%c0_1, %c0_2] : memref<8x128xf32, #tpu.memory_space<vmem>>, vector<1x128xf32>
    tpu.vector_store %arg4[%c0_1, %c0_2], %3 {strides = array<i32>} : memref<8x128xf32, #tpu.memory_space<vmem>>, vector<1x128xf32>,
    %c1 = arith.constant 1 : index
    %5 = memref.load %arg0[%c1] : memref<8xi32, #tpu.memory_space<smem>>
    %c0_i32_3 = arith.constant 0 : i32
    %6 = arith.addi %c0_i32_3, %5 : i32
    %7 = arith.index_cast %6 : i32 to index
    %c0_4 = arith.constant 0 : index
    %8 = vector.load %arg2[%7, %c0_4] : memref<192x128xf32, #tpu.memory_space<vmem>>, vector<1x128xf32>
    %c1_5 = arith.constant 1 : index
    %c0_6 = arith.constant 0 : index
    %9 = vector.load %arg4[%c1_5, %c0_6] : memref<8x128xf32, #tpu.memory_space<vmem>>, vector<1x128xf32>
    tpu.vector_store %arg4[%c1_5, %c0_6], %8 {strides = array<i32>} : memref<8x128xf32, #tpu.memory_space<vmem>>, vector<1x128xf32>,
    %c2 = arith.constant 2 : index
    %10 = memref.load %arg0[%c2] : memref<8xi32, #tpu.memory_space<smem>>
    %c0_i32_7 = arith.constant 0 : i32
    %11 = arith.addi %c0_i32_7, %10 : i32
    %12 = arith.index_cast %11 : i32 to index
    %c0_8 = arith.constant 0 : index
    %13 = vector.load %arg2[%12, %c0_8] : memref<192x128xf32, #tpu.memory_space<vmem>>, vector<1x128xf32>
    %c2_9 = arith.constant 2 : index
    %c0_10 = arith.constant 0 : index
    %14 = vector.load %arg4[%c2_9, %c0_10] : memref<8x128xf32, #tpu.memory_space<vmem>>, vector<1x128xf32>
    tpu.vector_store %arg4[%c2_9, %c0_10], %13 {strides = array<i32>} : memref<8x128xf32, #tpu.memory_space<vmem>>, vector<1x128xf32>,
    %c3 = arith.constant 3 : index
    %15 = memref.load %arg0[%c3] : memref<8xi32, #tpu.memory_space<smem>>
    %c0_i32_11 = arith.constant 0 : i32
    %16 = arith.addi %c0_i32_11, %15 : i32
    %17 = arith.index_cast %16 : i32 to index
    %c0_12 = arith.constant 0 : index
    %18 = vector.load %arg2[%17, %c0_12] : memref<192x128xf32, #tpu.memory_space<vmem>>, vector<1x128xf32>
    %c3_13 = arith.constant 3 : index
    %c0_14 = arith.constant 0 : index
    %19 = vector.load %arg4[%c3_13, %c0_14] : memref<8x128xf32, #tpu.memory_space<vmem>>, vector<1x128xf32>
    tpu.vector_store %arg4[%c3_13, %c0_14], %18 {strides = array<i32>} : memref<8x128xf32, #tpu.memory_space<vmem>>, vector<1x128xf32>,
    %c4 = arith.constant 4 : index
    %20 = memref.load %arg0[%c4] : memref<8xi32, #tpu.memory_space<smem>>
    %c0_i32_15 = arith.constant 0 : i32
    %21 = arith.addi %c0_i32_15, %20 : i32
    %22 = arith.index_cast %21 : i32 to index
    %c0_16 = arith.constant 0 : index
    %23 = vector.load %arg2[%22, %c0_16] : memref<192x128xf32, #tpu.memory_space<vmem>>, vector<1x128xf32>
    %c4_17 = arith.constant 4 : index
    %c0_18 = arith.constant 0 : index
    %24 = vector.load %arg4[%c4_17, %c0_18] : memref<8x128xf32, #tpu.memory_space<vmem>>, vector<1x128xf32>
    tpu.vector_store %arg4[%c4_17, %c0_18], %23 {strides = array<i32>} : memref<8x128xf32, #tpu.memory_space<vmem>>, vector<1x128xf32>,
    %c5 = arith.constant 5 : index
    %25 = memref.load %arg0[%c5] : memref<8xi32, #tpu.memory_space<smem>>
    %c0_i32_19 = arith.constant 0 : i32
    %26 = arith.addi %c0_i32_19, %25 : i32
    %27 = arith.index_cast %26 : i32 to index
    %c0_20 = arith.constant 0 : index
    %28 = vector.load %arg2[%27, %c0_20] : memref<192x128xf32, #tpu.memory_space<vmem>>, vector<1x128xf32>
    %c5_21 = arith.constant 5 : index
    %c0_22 = arith.constant 0 : index
    %29 = vector.load %arg4[%c5_21, %c0_22] : memref<8x128xf32, #tpu.memory_space<vmem>>, vector<1x128xf32>
    tpu.vector_store %arg4[%c5_21, %c0_22], %28 {strides = array<i32>} : memref<8x128xf32, #tpu.memory_space<vmem>>, vector<1x128xf32>,
    %c6 = arith.constant 6 : index
    %30 = memref.load %arg0[%c6] : memref<8xi32, #tpu.memory_space<smem>>
    %c0_i32_23 = arith.constant 0 : i32
    %31 = arith.addi %c0_i32_23, %30 : i32
    %32 = arith.index_cast %31 : i32 to index
    %c0_24 = arith.constant 0 : index
    %33 = vector.load %arg2[%32, %c0_24] : memref<192x128xf32, #tpu.memory_space<vmem>>, vector<1x128xf32>
    %c6_25 = arith.constant 6 : index
    %c0_26 = arith.constant 0 : index
    %34 = vector.load %arg4[%c6_25, %c0_26] : memref<8x128xf32, #tpu.memory_space<vmem>>, vector<1x128xf32>
    tpu.vector_store %arg4[%c6_25, %c0_26], %33 {strides = array<i32>} : memref<8x128xf32, #tpu.memory_space<vmem>>, vector<1x128xf32>,
    %c7 = arith.constant 7 : index
    %35 = memref.load %arg0[%c7] : memref<8xi32, #tpu.memory_space<smem>>
    %c0_i32_27 = arith.constant 0 : i32
    %36 = arith.addi %c0_i32_27, %35 : i32
    %37 = arith.index_cast %36 : i32 to index
    %c0_28 = arith.constant 0 : index
    %38 = vector.load %arg2[%37, %c0_28] : memref<192x128xf32, #tpu.memory_space<vmem>>, vector<1x128xf32>
    %c7_29 = arith.constant 7 : index
    %c0_30 = arith.constant 0 : index
    %39 = vector.load %arg4[%c7_29, %c0_30] : memref<8x128xf32, #tpu.memory_space<vmem>>, vector<1x128xf32>
    tpu.vector_store %arg4[%c7_29, %c0_30], %38 {strides = array<i32>} : memref<8x128xf32, #tpu.memory_space<vmem>>, vector<1x128xf32>,
    %c0_31 = arith.constant 0 : index
    %c0_32 = arith.constant 0 : index
    %40 = vector.load %arg4[%c0_31, %c0_32] : memref<8x128xf32, #tpu.memory_space<vmem>>, vector<8x128xf32>
    %41 = vector.extract_strided_slice %40 {offsets = [0, 0], sizes = [8, 32], strides = [1, 1]} : vector<8x128xf32> to vector<8x32xf32>
    %c16 = arith.constant 16 : index
    %c0_33 = arith.constant 0 : index
    %42 = vector.load %arg2[%c16, %c0_33] : memref<192x128xf32, #tpu.memory_space<vmem>>, vector<32x32xf32>
    %c48 = arith.constant 48 : index
    %c0_34 = arith.constant 0 : index
    %43 = vector.load %arg2[%c48, %c0_34] : memref<192x128xf32, #tpu.memory_space<vmem>>, vector<4x32xf32>
    %c0_35 = arith.constant 0 : index
    %c0_36 = arith.constant 0 : index
    %c0_37 = arith.constant 0 : index
    %44 = vector.load %arg1[%c0_35, %c0_36, %c0_37] : memref<2x224x128xbf16, #tpu.memory_space<vmem>>, vector<1x32x128xbf16>
    %45 = vector.shape_cast %44 : vector<1x32x128xbf16> to vector<32x128xbf16>
    %c0_38 = arith.constant 0 : index
    %c32 = arith.constant 32 : index
    %c0_39 = arith.constant 0 : index
    %46 = vector.load %arg1[%c0_38, %c32, %c0_39] : memref<2x224x128xbf16, #tpu.memory_space<vmem>>, vector<1x32x128xbf16>
    %47 = vector.shape_cast %46 : vector<1x32x128xbf16> to vector<32x128xbf16>
    %c0_40 = arith.constant 0 : index
    %c64 = arith.constant 64 : index
    %c0_41 = arith.constant 0 : index
    %48 = vector.load %arg1[%c0_40, %c64, %c0_41] : memref<2x224x128xbf16, #tpu.memory_space<vmem>>, vector<1x32x128xbf16>
    %49 = vector.shape_cast %48 : vector<1x32x128xbf16> to vector<32x128xbf16>
    %c0_42 = arith.constant 0 : index
    %c96 = arith.constant 96 : index
    %c0_43 = arith.constant 0 : index
    %50 = vector.load %arg1[%c0_42, %c96, %c0_43] : memref<2x224x128xbf16, #tpu.memory_space<vmem>>, vector<1x128x128xbf16>
    %51 = vector.shape_cast %50 : vector<1x128x128xbf16> to vector<128x128xbf16>
    %52 = arith.truncf %41 : vector<8x32xf32> to vector<8x32xbf16>
    %cst = arith.constant dense<0.000000e+00> : vector<8x128xf32>
    %53 = tpu.matmul %52, %45, %cst {dimension_numbers = #tpu.dot_dimension_numbers<[1], [0], [0], [1], [0, 0, 1, 1], [], []>} : vector<8x32xbf16>, vector<32x128xbf16>, vector<8x128xf32> -> vector<8x128xf32>
    %c64_44 = arith.constant 64 : index
    %c0_45 = arith.constant 0 : index
    %54 = vector.load %arg2[%c64_44, %c0_45] : memref<192x128xf32, #tpu.memory_space<vmem>>, vector<8x128xf32>
    %55 = arith.addf %53, %54 : vector<8x128xf32>
    %56 = vector.extract_strided_slice %55 {offsets = [0, 0], sizes = [8, 32], strides = [1, 1]} : vector<8x128xf32> to vector<8x32xf32>
    %57 = vector.extract_strided_slice %55 {offsets = [0, 32], sizes = [8, 32], strides = [1, 1]} : vector<8x128xf32> to vector<8x32xf32>
    %58 = vector.extract_strided_slice %55 {offsets = [0, 64], sizes = [8, 32], strides = [1, 1]} : vector<8x128xf32> to vector<8x32xf32>
    %59 = tpu.concatenate %56, %56, %56, %56 in 0 : vector<8x32xf32>, vector<8x32xf32>, vector<8x32xf32>, vector<8x32xf32> -> vector<32x32xf32>
    %60 = arith.mulf %59, %42 : vector<32x32xf32>
    %61 = arith.truncf %60 : vector<32x32xf32> to vector<32x32xbf16>
    %62 = arith.truncf %57 : vector<8x32xf32> to vector<8x32xbf16>
    %cst_46 = arith.constant dense<0.000000e+00> : vector<32x8xf32>
    %63 = tpu.matmul %61, %62, %cst_46 {dimension_numbers = #tpu.dot_dimension_numbers<[1], [1], [0], [0], [0, 0, 1, 0], [], []>} : vector<32x32xbf16>, vector<8x32xbf16>, vector<32x8xf32> -> vector<32x8xf32>
    %cst_47 = arith.constant dense<0xFF800000> : vector<32xf32>
    %64 = vector.multi_reduction <maximumf>, %63, %cst_47 [1] : vector<32x8xf32> to vector<32xf32>
    %65 = vector.shape_cast %64 : vector<32xf32> to vector<32x1xf32>
    %66 = vector.broadcast %65 : vector<32x1xf32> to vector<32x8xf32>
    %67 = arith.subf %63, %66 : vector<32x8xf32>
    %68 = math.exp %67 : vector<32x8xf32>
    %cst_48 = arith.constant dense<0.000000e+00> : vector<32xf32>
    %69 = vector.multi_reduction <add>, %68, %cst_48 [1] : vector<32x8xf32> to vector<32xf32>
    %70 = vector.shape_cast %69 : vector<32xf32> to vector<32x1xf32>
    %71 = vector.broadcast %70 : vector<32x1xf32> to vector<32x8xf32>
    %72 = arith.divf %68, %71 : vector<32x8xf32>
    %73 = arith.truncf %72 : vector<32x8xf32> to vector<32x8xbf16>
    %74 = arith.truncf %58 : vector<8x32xf32> to vector<8x32xbf16>
    %cst_49 = arith.constant dense<0.000000e+00> : vector<32x32xf32>
    %75 = tpu.matmul %73, %74, %cst_49 {dimension_numbers = #tpu.dot_dimension_numbers<[1], [0], [0], [1], [0, 0, 1, 1], [], []>} : vector<32x8xbf16>, vector<8x32xbf16>, vector<32x32xf32> -> vector<32x32xf32>
    %76 = arith.mulf %75, %42 : vector<32x32xf32>
    %77 = vector.shape_cast %76 : vector<32x32xf32> to vector<4x8x32xf32>
    %cst_50 = arith.constant dense<0.000000e+00> : vector<8x32xf32>
    %78 = vector.multi_reduction <add>, %77, %cst_50 [0] : vector<4x8x32xf32> to vector<8x32xf32>
    %79 = arith.truncf %78 : vector<8x32xf32> to vector<8x32xbf16>
    %cst_51 = arith.constant dense<0.000000e+00> : vector<8x128xf32>
    %80 = tpu.matmul %79, %47, %cst_51 {dimension_numbers = #tpu.dot_dimension_numbers<[1], [0], [0], [1], [0, 0, 1, 1], [], []>} : vector<8x32xbf16>, vector<32x128xbf16>, vector<8x128xf32> -> vector<8x128xf32>
    %81 = vector.extract_strided_slice %80 {offsets = [0, 0], sizes = [8, 32], strides = [1, 1]} : vector<8x128xf32> to vector<8x32xf32>
    %c72 = arith.constant 72 : index
    %c0_52 = arith.constant 0 : index
    %82 = vector.load %arg2[%c72, %c0_52] : memref<192x128xf32, #tpu.memory_space<vmem>>, vector<8x32xf32>
    %83 = arith.addf %81, %82 : vector<8x32xf32>
    %84 = arith.addf %41, %83 : vector<8x32xf32>
    %c80 = arith.constant 80 : index
    %c0_53 = arith.constant 0 : index
    %85 = vector.load %arg2[%c80, %c0_53] : memref<192x128xf32, #tpu.memory_space<vmem>>, vector<8x32xf32>
    %c88 = arith.constant 88 : index
    %c0_54 = arith.constant 0 : index
    %86 = vector.load %arg2[%c88, %c0_54] : memref<192x128xf32, #tpu.memory_space<vmem>>, vector<8x32xf32>
    %cst_55 = arith.constant dense<0.000000e+00> : vector<8xf32>
    %87 = vector.multi_reduction <add>, %84, %cst_55 [1] : vector<8x32xf32> to vector<8xf32>
    %88 = vector.shape_cast %87 : vector<8xf32> to vector<8x1xf32>
    %cst_56 = arith.constant 3.200000e+01 : f32
    %89 = vector.broadcast %cst_56 : f32 to vector<8x1xf32>
    %90 = arith.divf %88, %89 : vector<8x1xf32>
    %91 = vector.broadcast %90 : vector<8x1xf32> to vector<8x32xf32>
    %92 = arith.subf %84, %91 : vector<8x32xf32>
    %93 = arith.mulf %92, %92 : vector<8x32xf32>
    %cst_57 = arith.constant dense<0.000000e+00> : vector<8xf32>
    %94 = vector.multi_reduction <add>, %93, %cst_57 [1] : vector<8x32xf32> to vector<8xf32>
    %95 = vector.shape_cast %94 : vector<8xf32> to vector<8x1xf32>
    %cst_58 = arith.constant 3.200000e+01 : f32
    %96 = vector.broadcast %cst_58 : f32 to vector<8x1xf32>
    %97 = arith.divf %95, %96 : vector<8x1xf32>
    %98 = vector.broadcast %90 : vector<8x1xf32> to vector<8x32xf32>
    %99 = arith.subf %84, %98 : vector<8x32xf32>
    %cst_59 = arith.constant 9.99999974E-6 : f32
    %100 = vector.broadcast %cst_59 : f32 to vector<8x1xf32>
    %101 = arith.addf %97, %100 : vector<8x1xf32>
    %102 = math.rsqrt %101 : vector<8x1xf32>
    %103 = vector.broadcast %102 : vector<8x1xf32> to vector<8x32xf32>
    %104 = arith.mulf %99, %103 : vector<8x32xf32>
    %105 = arith.mulf %104, %85 : vector<8x32xf32>
    %106 = arith.addf %105, %86 : vector<8x32xf32>
    %107 = arith.truncf %106 : vector<8x32xf32> to vector<8x32xbf16>
    %cst_60 = arith.constant dense<0.000000e+00> : vector<8x128xf32>
    %108 = tpu.matmul %107, %49, %cst_60 {dimension_numbers = #tpu.dot_dimension_numbers<[1], [0], [0], [1], [0, 0, 1, 1], [], []>} : vector<8x32xbf16>, vector<32x128xbf16>, vector<8x128xf32> -> vector<8x128xf32>
    %c96_61 = arith.constant 96 : index
    %c0_62 = arith.constant 0 : index
    %109 = vector.load %arg2[%c96_61, %c0_62] : memref<192x128xf32, #tpu.memory_space<vmem>>, vector<8x128xf32>
    %110 = arith.addf %108, %109 : vector<8x128xf32>
    %cst_63 = arith.constant 0.000000e+00 : f32
    %111 = vector.broadcast %cst_63 : f32 to vector<8x128xf32>
    %112 = arith.maximumf %110, %111 : vector<8x128xf32>
    %113 = arith.truncf %112 : vector<8x128xf32> to vector<8x128xbf16>
    %cst_64 = arith.constant dense<0.000000e+00> : vector<8x128xf32>
    %114 = tpu.matmul %113, %51, %cst_64 {dimension_numbers = #tpu.dot_dimension_numbers<[1], [0], [0], [1], [0, 0, 1, 1], [], []>} : vector<8x128xbf16>, vector<128x128xbf16>, vector<8x128xf32> -> vector<8x128xf32>
    %115 = vector.extract_strided_slice %114 {offsets = [0, 0], sizes = [8, 32], strides = [1, 1]} : vector<8x128xf32> to vector<8x32xf32>
    %c104 = arith.constant 104 : index
    %c0_65 = arith.constant 0 : index
    %116 = vector.load %arg2[%c104, %c0_65] : memref<192x128xf32, #tpu.memory_space<vmem>>, vector<8x32xf32>
    %117 = arith.addf %115, %116 : vector<8x32xf32>
    %118 = arith.addf %106, %117 : vector<8x32xf32>
    %c112 = arith.constant 112 : index
    %c0_66 = arith.constant 0 : index
    %119 = vector.load %arg2[%c112, %c0_66] : memref<192x128xf32, #tpu.memory_space<vmem>>, vector<8x32xf32>
    %c120 = arith.constant 120 : index
    %c0_67 = arith.constant 0 : index
    %120 = vector.load %arg2[%c120, %c0_67] : memref<192x128xf32, #tpu.memory_space<vmem>>, vector<8x32xf32>
    %cst_68 = arith.constant dense<0.000000e+00> : vector<8xf32>
    %121 = vector.multi_reduction <add>, %118, %cst_68 [1] : vector<8x32xf32> to vector<8xf32>
    %122 = vector.shape_cast %121 : vector<8xf32> to vector<8x1xf32>
    %cst_69 = arith.constant 3.200000e+01 : f32
    %123 = vector.broadcast %cst_69 : f32 to vector<8x1xf32>
    %124 = arith.divf %122, %123 : vector<8x1xf32>
    %125 = vector.broadcast %124 : vector<8x1xf32> to vector<8x32xf32>
    %126 = arith.subf %118, %125 : vector<8x32xf32>
    %127 = arith.mulf %126, %126 : vector<8x32xf32>
    %cst_70 = arith.constant dense<0.000000e+00> : vector<8xf32>
    %128 = vector.multi_reduction <add>, %127, %cst_70 [1] : vector<8x32xf32> to vector<8xf32>
    %129 = vector.shape_cast %128 : vector<8xf32> to vector<8x1xf32>
    %cst_71 = arith.constant 3.200000e+01 : f32
    %130 = vector.broadcast %cst_71 : f32 to vector<8x1xf32>
    %131 = arith.divf %129, %130 : vector<8x1xf32>
    %132 = vector.broadcast %124 : vector<8x1xf32> to vector<8x32xf32>
    %133 = arith.subf %118, %132 : vector<8x32xf32>
    %cst_72 = arith.constant 9.99999974E-6 : f32
    %134 = vector.broadcast %cst_72 : f32 to vector<8x1xf32>
    %135 = arith.addf %131, %134 : vector<8x1xf32>
    %136 = math.rsqrt %135 : vector<8x1xf32>
    %137 = vector.broadcast %136 : vector<8x1xf32> to vector<8x32xf32>
    %138 = arith.mulf %133, %137 : vector<8x32xf32>
    %139 = arith.mulf %138, %119 : vector<8x32xf32>
    %140 = arith.addf %139, %120 : vector<8x32xf32>
    %c1_73 = arith.constant 1 : index
    %c0_74 = arith.constant 0 : index
    %c0_75 = arith.constant 0 : index
    %141 = vector.load %arg1[%c1_73, %c0_74, %c0_75] : memref<2x224x128xbf16, #tpu.memory_space<vmem>>, vector<1x32x128xbf16>
    %142 = vector.shape_cast %141 : vector<1x32x128xbf16> to vector<32x128xbf16>
    %c1_76 = arith.constant 1 : index
    %c32_77 = arith.constant 32 : index
    %c0_78 = arith.constant 0 : index
    %143 = vector.load %arg1[%c1_76, %c32_77, %c0_78] : memref<2x224x128xbf16, #tpu.memory_space<vmem>>, vector<1x32x128xbf16>
    %144 = vector.shape_cast %143 : vector<1x32x128xbf16> to vector<32x128xbf16>
    %c1_79 = arith.constant 1 : index
    %c64_80 = arith.constant 64 : index
    %c0_81 = arith.constant 0 : index
    %145 = vector.load %arg1[%c1_79, %c64_80, %c0_81] : memref<2x224x128xbf16, #tpu.memory_space<vmem>>, vector<1x32x128xbf16>
    %146 = vector.shape_cast %145 : vector<1x32x128xbf16> to vector<32x128xbf16>
    %c1_82 = arith.constant 1 : index
    %c96_83 = arith.constant 96 : index
    %c0_84 = arith.constant 0 : index
    %147 = vector.load %arg1[%c1_82, %c96_83, %c0_84] : memref<2x224x128xbf16, #tpu.memory_space<vmem>>, vector<1x128x128xbf16>
    %148 = vector.shape_cast %147 : vector<1x128x128xbf16> to vector<128x128xbf16>
    %149 = arith.truncf %140 : vector<8x32xf32> to vector<8x32xbf16>
    %cst_85 = arith.constant dense<0.000000e+00> : vector<8x128xf32>
    %150 = tpu.matmul %149, %142, %cst_85 {dimension_numbers = #tpu.dot_dimension_numbers<[1], [0], [0], [1], [0, 0, 1, 1], [], []>} : vector<8x32xbf16>, vector<32x128xbf16>, vector<8x128xf32> -> vector<8x128xf32>
    %c128 = arith.constant 128 : index
    %c0_86 = arith.constant 0 : index
    %151 = vector.load %arg2[%c128, %c0_86] : memref<192x128xf32, #tpu.memory_space<vmem>>, vector<8x128xf32>
    %152 = arith.addf %150, %151 : vector<8x128xf32>
    %153 = vector.extract_strided_slice %152 {offsets = [0, 32], sizes = [8, 32], strides = [1, 1]} : vector<8x128xf32> to vector<8x32xf32>
    %154 = vector.extract_strided_slice %152 {offsets = [0, 64], sizes = [8, 32], strides = [1, 1]} : vector<8x128xf32> to vector<8x32xf32>
    %155 = vector.extract_strided_slice %152 {offsets = [7, 0], sizes = [1, 32], strides = [1, 1]} : vector<8x128xf32> to vector<1x32xf32>
    %156 = vector.broadcast %155 : vector<1x32xf32> to vector<4x32xf32>
    %157 = arith.mulf %156, %43 : vector<4x32xf32>
    %158 = arith.truncf %157 : vector<4x32xf32> to vector<4x32xbf16>
    %159 = arith.truncf %153 : vector<8x32xf32> to vector<8x32xbf16>
    %cst_87 = arith.constant dense<0.000000e+00> : vector<4x8xf32>
    %160 = tpu.matmul %158, %159, %cst_87 {dimension_numbers = #tpu.dot_dimension_numbers<[1], [1], [0], [0], [0, 0, 1, 0], [], []>} : vector<4x32xbf16>, vector<8x32xbf16>, vector<4x8xf32> -> vector<4x8xf32>
    %cst_88 = arith.constant dense<0xFF800000> : vector<4xf32>
    %161 = vector.multi_reduction <maximumf>, %160, %cst_88 [1] : vector<4x8xf32> to vector<4xf32>
    %162 = vector.shape_cast %161 : vector<4xf32> to vector<4x1xf32>
    %163 = vector.broadcast %162 : vector<4x1xf32> to vector<4x8xf32>
    %164 = arith.subf %160, %163 : vector<4x8xf32>
    %165 = math.exp %164 : vector<4x8xf32>
    %cst_89 = arith.constant dense<0.000000e+00> : vector<4xf32>
    %166 = vector.multi_reduction <add>, %165, %cst_89 [1] : vector<4x8xf32> to vector<4xf32>
    %167 = vector.shape_cast %166 : vector<4xf32> to vector<4x1xf32>
    %168 = vector.broadcast %167 : vector<4x1xf32> to vector<4x8xf32>
    %169 = arith.divf %165, %168 : vector<4x8xf32>
    %170 = arith.truncf %169 : vector<4x8xf32> to vector<4x8xbf16>
    %171 = arith.truncf %154 : vector<8x32xf32> to vector<8x32xbf16>
    %cst_90 = arith.constant dense<0.000000e+00> : vector<4x32xf32>
    %172 = tpu.matmul %170, %171, %cst_90 {dimension_numbers = #tpu.dot_dimension_numbers<[1], [0], [0], [1], [0, 0, 1, 1], [], []>} : vector<4x8xbf16>, vector<8x32xbf16>, vector<4x32xf32> -> vector<4x32xf32>
    %173 = arith.mulf %172, %43 : vector<4x32xf32>
    %cst_91 = arith.constant dense<0.000000e+00> : vector<32xf32>
    %174 = vector.multi_reduction <add>, %173, %cst_91 [0] : vector<4x32xf32> to vector<32xf32>
    %175 = vector.shape_cast %174 : vector<32xf32> to vector<1x32xf32>
    %176 = arith.truncf %175 : vector<1x32xf32> to vector<1x32xbf16>
    %cst_92 = arith.constant dense<0.000000e+00> : vector<1x128xf32>
    %177 = tpu.matmul %176, %144, %cst_92 {dimension_numbers = #tpu.dot_dimension_numbers<[1], [0], [0], [1], [0, 0, 1, 1], [], []>} : vector<1x32xbf16>, vector<32x128xbf16>, vector<1x128xf32> -> vector<1x128xf32>
    %178 = vector.extract_strided_slice %177 {offsets = [0, 0], sizes = [1, 32], strides = [1, 1]} : vector<1x128xf32> to vector<1x32xf32>
    %c136 = arith.constant 136 : index
    %c0_93 = arith.constant 0 : index
    %179 = vector.load %arg2[%c136, %c0_93] : memref<192x128xf32, #tpu.memory_space<vmem>>, vector<1x32xf32>
    %180 = arith.addf %178, %179 : vector<1x32xf32>
    %181 = vector.extract_strided_slice %140 {offsets = [7, 0], sizes = [1, 32], strides = [1, 1]} : vector<8x32xf32> to vector<1x32xf32>
    %182 = arith.addf %181, %180 : vector<1x32xf32>
    %c144 = arith.constant 144 : index
    %c0_94 = arith.constant 0 : index
    %183 = vector.load %arg2[%c144, %c0_94] : memref<192x128xf32, #tpu.memory_space<vmem>>, vector<1x32xf32>
    %c152 = arith.constant 152 : index
    %c0_95 = arith.constant 0 : index
    %184 = vector.load %arg2[%c152, %c0_95] : memref<192x128xf32, #tpu.memory_space<vmem>>, vector<1x32xf32>
    %cst_96 = arith.constant dense<0.000000e+00> : vector<1xf32>
    %185 = vector.multi_reduction <add>, %182, %cst_96 [1] : vector<1x32xf32> to vector<1xf32>
    %186 = vector.shape_cast %185 : vector<1xf32> to vector<1x1xf32>
    %cst_97 = arith.constant 3.200000e+01 : f32
    %187 = vector.broadcast %cst_97 : f32 to vector<1x1xf32>
    %188 = arith.divf %186, %187 : vector<1x1xf32>
    %189 = vector.broadcast %188 : vector<1x1xf32> to vector<1x32xf32>
    %190 = arith.subf %182, %189 : vector<1x32xf32>
    %191 = arith.mulf %190, %190 : vector<1x32xf32>
    %cst_98 = arith.constant dense<0.000000e+00> : vector<1xf32>
    %192 = vector.multi_reduction <add>, %191, %cst_98 [1] : vector<1x32xf32> to vector<1xf32>
    %193 = vector.shape_cast %192 : vector<1xf32> to vector<1x1xf32>
    %cst_99 = arith.constant 3.200000e+01 : f32
    %194 = vector.broadcast %cst_99 : f32 to vector<1x1xf32>
    %195 = arith.divf %193, %194 : vector<1x1xf32>
    %196 = vector.broadcast %188 : vector<1x1xf32> to vector<1x32xf32>
    %197 = arith.subf %182, %196 : vector<1x32xf32>
    %cst_100 = arith.constant 9.99999974E-6 : f32
    %198 = vector.broadcast %cst_100 : f32 to vector<1x1xf32>
    %199 = arith.addf %195, %198 : vector<1x1xf32>
    %200 = math.rsqrt %199 : vector<1x1xf32>
    %201 = vector.broadcast %200 : vector<1x1xf32> to vector<1x32xf32>
    %202 = arith.mulf %197, %201 : vector<1x32xf32>
    %203 = arith.mulf %202, %183 : vector<1x32xf32>
    %204 = arith.addf %203, %184 : vector<1x32xf32>
    %205 = arith.truncf %204 : vector<1x32xf32> to vector<1x32xbf16>
    %cst_101 = arith.constant dense<0.000000e+00> : vector<1x128xf32>
    %206 = tpu.matmul %205, %146, %cst_101 {dimension_numbers = #tpu.dot_dimension_numbers<[1], [0], [0], [1], [0, 0, 1, 1], [], []>} : vector<1x32xbf16>, vector<32x128xbf16>, vector<1x128xf32> -> vector<1x128xf32>
    %c160 = arith.constant 160 : index
    %c0_102 = arith.constant 0 : index
    %207 = vector.load %arg2[%c160, %c0_102] : memref<192x128xf32, #tpu.memory_space<vmem>>, vector<1x128xf32>
    %208 = arith.addf %206, %207 : vector<1x128xf32>
    %cst_103 = arith.constant 0.000000e+00 : f32
    %209 = vector.broadcast %cst_103 : f32 to vector<1x128xf32>
    %210 = arith.maximumf %208, %209 : vector<1x128xf32>
    %211 = arith.truncf %210 : vector<1x128xf32> to vector<1x128xbf16>
    %cst_104 = arith.constant dense<0.000000e+00> : vector<1x128xf32>
    %212 = tpu.matmul %211, %148, %cst_104 {dimension_numbers = #tpu.dot_dimension_numbers<[1], [0], [0], [1], [0, 0, 1, 1], [], []>} : vector<1x128xbf16>, vector<128x128xbf16>, vector<1x128xf32> -> vector<1x128xf32>
    %213 = vector.extract_strided_slice %212 {offsets = [0, 0], sizes = [1, 32], strides = [1, 1]} : vector<1x128xf32> to vector<1x32xf32>
    %c168 = arith.constant 168 : index
    %c0_105 = arith.constant 0 : index
    %214 = vector.load %arg2[%c168, %c0_105] : memref<192x128xf32, #tpu.memory_space<vmem>>, vector<1x32xf32>
    %215 = arith.addf %213, %214 : vector<1x32xf32>
    %216 = arith.addf %204, %215 : vector<1x32xf32>
    %c176 = arith.constant 176 : index
    %c0_106 = arith.constant 0 : index
    %217 = vector.load %arg2[%c176, %c0_106] : memref<192x128xf32, #tpu.memory_space<vmem>>, vector<1x32xf32>
    %c184 = arith.constant 184 : index
    %c0_107 = arith.constant 0 : index
    %218 = vector.load %arg2[%c184, %c0_107] : memref<192x128xf32, #tpu.memory_space<vmem>>, vector<1x32xf32>
    %cst_108 = arith.constant dense<0.000000e+00> : vector<1xf32>
    %219 = vector.multi_reduction <add>, %216, %cst_108 [1] : vector<1x32xf32> to vector<1xf32>
    %220 = vector.shape_cast %219 : vector<1xf32> to vector<1x1xf32>
    %cst_109 = arith.constant 3.200000e+01 : f32
    %221 = vector.broadcast %cst_109 : f32 to vector<1x1xf32>
    %222 = arith.divf %220, %221 : vector<1x1xf32>
    %223 = vector.broadcast %222 : vector<1x1xf32> to vector<1x32xf32>
    %224 = arith.subf %216, %223 : vector<1x32xf32>
    %225 = arith.mulf %224, %224 : vector<1x32xf32>
    %cst_110 = arith.constant dense<0.000000e+00> : vector<1xf32>
    %226 = vector.multi_reduction <add>, %225, %cst_110 [1] : vector<1x32xf32> to vector<1xf32>
    %227 = vector.shape_cast %226 : vector<1xf32> to vector<1x1xf32>
    %cst_111 = arith.constant 3.200000e+01 : f32
    %228 = vector.broadcast %cst_111 : f32 to vector<1x1xf32>
    %229 = arith.divf %227, %228 : vector<1x1xf32>
    %230 = vector.broadcast %222 : vector<1x1xf32> to vector<1x32xf32>
    %231 = arith.subf %216, %230 : vector<1x32xf32>
    %cst_112 = arith.constant 9.99999974E-6 : f32
    %232 = vector.broadcast %cst_112 : f32 to vector<1x1xf32>
    %233 = arith.addf %229, %232 : vector<1x1xf32>
    %234 = math.rsqrt %233 : vector<1x1xf32>
    %235 = vector.broadcast %234 : vector<1x1xf32> to vector<1x32xf32>
    %236 = arith.mulf %231, %235 : vector<1x32xf32>
    %237 = arith.mulf %236, %217 : vector<1x32xf32>
    %238 = arith.addf %237, %218 : vector<1x32xf32>
    %c56 = arith.constant 56 : index
    %c0_113 = arith.constant 0 : index
    %239 = vector.load %arg2[%c56, %c0_113] : memref<192x128xf32, #tpu.memory_space<vmem>>, vector<1x32xf32>
    %c56_114 = arith.constant 56 : index
    %c32_115 = arith.constant 32 : index
    %240 = vector.load %arg2[%c56_114, %c32_115] : memref<192x128xf32, #tpu.memory_space<vmem>>, vector<1x1xf32>
    %241 = arith.mulf %238, %239 : vector<1x32xf32>
    %cst_116 = arith.constant dense<0.000000e+00> : vector<1xf32>
    %242 = vector.multi_reduction <add>, %241, %cst_116 [1] : vector<1x32xf32> to vector<1xf32>
    %243 = vector.shape_cast %242 : vector<1xf32> to vector<1x1xf32>
    %244 = arith.addf %243, %240 : vector<1x1xf32>
    %c0_117 = arith.constant 0 : index
    %c0_118 = arith.constant 0 : index
    %245 = vector.load %arg3[%c0_117, %c0_118] : memref<1x1xf32, #tpu.memory_space<vmem>>, vector<1x1xf32>
    tpu.vector_store %arg3[%c0_117, %c0_118], %244 {strides = array<i32>} : memref<1x1xf32, #tpu.memory_space<vmem>>, vector<1x1xf32>,
    return
  }
}

</mosaic_0001>

<llo_original>
// kernel: tpu_custom_call.1
$region0: #{tpu_custom_call.1}
  #allocation0 [shape = 'u32[]', space=smem, size = 0x4, offset = 0x4, fixed_abs, tag = 'smem constant byte address 0x4 - core index']
  #allocation1 [shape = 'u32[144,128]{1,0:T(1,128)}', space=vmem, size = 0x12000, scoped, tag = 'internal scratch']
  #allocation2 [shape = 'f32[8,128]{1,0:T(8,128)}', space=vmem, size = 0x1000, scoped, tag = 'scratch operand']
  %s0 = inlined_call_operand.hbm [shape: s32[8], index: 0, kind: input, shape index: {}]
  %s1 = inlined_call_operand.hbm [shape: bf16[2,224,128], index: 1, kind: input, shape index: {}]
  %s2 = inlined_call_operand.hbm [shape: f32[192,128], index: 2, kind: input, shape index: {}]
  %s3 = inlined_call_operand.hbm [shape: f32[1,1], index: 3, kind: output, shape index: {}]
  %s4 = sld [smem:[#allocation0]]
  $region34: #{tpu_custom_call.1} parent=0
    _
  %s6 = ssub.s32 1, %s4
  %s7 = scalar_select 0, %s6, %s4
  $region1: #{tpu_custom_call.1} parent=0
    #allocation3 [shape = 'u8[512]{0}', space=smem, size = 0x200, scoped, tag = 'input window, operand 0, single buffered']
    #allocation4 [shape = 's32[1]{0}', space=sflag, size = 0x4, scoped, tag = 'scoped memory for tpu_custom_call.1']
    #allocation5 [shape = 's32[1]{0}', space=sflag, size = 0x4, scoped, tag = 'scoped memory for tpu_custom_call.1']
    #allocation6 [shape = 's32[1]{0}', space=sflag, size = 0x4, scoped, tag = 'scoped memory for tpu_custom_call.1']
    #allocation7 [shape = 'u8[114688]{0}', space=vmem, size = 0x1c000, scoped, tag = 'input window, operand 1, single buffered']
    #allocation8 [shape = 'u8[98304]{0}', space=vmem, size = 0x18000, scoped, tag = 'input window, operand 2, single buffered']
    #allocation9 [shape = 's32[1]{0}', space=sflag, size = 0x4, scoped, tag = 'scoped memory for tpu_custom_call.1']
    #allocation10 [shape = 'u8[512]{0}', space=vmem, size = 0x400, scoped, tag = 'output window, operand 0, single buffered']
    %8 = vsyncpa [#allocation6], 0
    %9 = vsyncpa [#allocation4], 0
    %10 = vsyncpa [#allocation9], 0
    %11 = vsyncpa [#allocation5], 0
    // Predicated region
    $region2: #{tpu_custom_call.1} parent=1 // pred_check
      _
    $region3: #{tpu_custom_call.1} parent=1 // pred_check_branch
      %13 = sbr.rel (0) target = $region5
    $region4: #{tpu_custom_call.1} parent=1 // pred_region
      %s15 = ssub.s32 16, 16
      %16 = vsyncadd [#allocation6], %s15
      %19 = dma.hbm_to_smem %s0, 16, [#allocation3], [#allocation6]
    $region5: #{tpu_custom_call.1} parent=1 // pred_fallthru
      _
    // Predicated region
    $region6: #{tpu_custom_call.1} parent=1 // pred_check
      _
    $region7: #{tpu_custom_call.1} parent=1 // pred_check_branch
      %21 = sbr.rel (0) target = $region9
    $region8: #{tpu_custom_call.1} parent=1 // pred_region
      %s23 = ssub.s32 3584, 3584
      %24 = vsyncadd [#allocation4], %s23
      %s25 = sshll.u32 [#allocation7], 4
      %s26 = int_to_ptr.vmem [resolvable:$true] %s25
      %31 = dma.hbm_to_vmem [thread:$0]  %s1, 3584, %s26, [#allocation4], 64, 64, 4
    $region9: #{tpu_custom_call.1} parent=1 // pred_fallthru
      _
    // Predicated region
    $region10: #{tpu_custom_call.1} parent=1 // pred_check
      _
    $region11: #{tpu_custom_call.1} parent=1 // pred_check_branch
      %33 = sbr.rel (0) target = $region13
    $region12: #{tpu_custom_call.1} parent=1 // pred_region
      %s35 = ssub.s32 3072, 3072
      %36 = vsyncadd [#allocation9], %s35
      %s37 = sshll.u32 [#allocation8], 4
      %s38 = int_to_ptr.vmem [resolvable:$true] %s37
      %43 = dma.hbm_to_vmem [thread:$0]  %s2, 3072, %s38, [#allocation9], 128, 128, 8
    $region13: #{tpu_custom_call.1} parent=1 // pred_fallthru
      _
    // Predicated region
    $region14: #{tpu_custom_call.1} parent=1 // pred_check
      _
    $region15: #{tpu_custom_call.1} parent=1 // pred_check_branch
      %45 = sbr.rel (0) target = $region17
    $region16: #{tpu_custom_call.1} parent=1 // pred_region
      %46 = dma.done [#allocation6], 16
    $region17: #{tpu_custom_call.1} parent=1 // pred_fallthru
      _
    // Predicated region
    $region18: #{tpu_custom_call.1} parent=1 // pred_check
      _
    $region19: #{tpu_custom_call.1} parent=1 // pred_check_branch
      %48 = sbr.rel (0) target = $region21
    $region20: #{tpu_custom_call.1} parent=1 // pred_region
      %49 = dma.done [#allocation4], 3584
    $region21: #{tpu_custom_call.1} parent=1 // pred_fallthru
      _
    // Predicated region
    $region22: #{tpu_custom_call.1} parent=1 // pred_check
      _
    $region23: #{tpu_custom_call.1} parent=1 // pred_check_branch
      %51 = sbr.rel (0) target = $region25
    $region24: #{tpu_custom_call.1} parent=1 // pred_region
      %52 = dma.done [#allocation9], 3072
    $region25: #{tpu_custom_call.1} parent=1 // pred_fallthru
      _
    %53 = sfence
    %s55 = sld [smem:[#allocation3]]
    %s56 = scalar_lea.vmem [#allocation8], %s55
    %v57 = vld [vmem:[%s56] sm:$0x1]
    %58 = vst [vmem:[#allocation2] sm:$0x1] %v57
    %s59 = sld [smem:[#allocation3 + $0x1]]
    %s60 = scalar_lea.vmem [#allocation8], %s59
    %v61 = vld [vmem:[%s60] sm:$0x1]
    %62 = vst [vmem:[#allocation2 + $0x1] sm:$0x1] %v61
    %s63 = sld [smem:[#allocation3 + $0x2]]
    %s64 = scalar_lea.vmem [#allocation8], %s63
    %v65 = vld [vmem:[%s64] sm:$0x1]
    %66 = vst [vmem:[#allocation2 + $0x2] sm:$0x1] %v65
    %s67 = sld [smem:[#allocation3 + $0x3]]
    %s68 = scalar_lea.vmem [#allocation8], %s67
    %v69 = vld [vmem:[%s68] sm:$0x1]
    %70 = vst [vmem:[#allocation2 + $0x3] sm:$0x1] %v69
    %s71 = sld [smem:[#allocation3 + $0x4]]
    %s72 = scalar_lea.vmem [#allocation8], %s71
    %v73 = vld [vmem:[%s72] sm:$0x1]
    %74 = vst [vmem:[#allocation2 + $0x4] sm:$0x1] %v73
    %s75 = sld [smem:[#allocation3 + $0x5]]
    %s76 = scalar_lea.vmem [#allocation8], %s75
    %v77 = vld [vmem:[%s76] sm:$0x1]
    %78 = vst [vmem:[#allocation2 + $0x5] sm:$0x1] %v77
    %s79 = sld [smem:[#allocation3 + $0x6]]
    %s80 = scalar_lea.vmem [#allocation8], %s79
    %v81 = vld [vmem:[%s80] sm:$0x1]
    %82 = vst [vmem:[#allocation2 + $0x6] sm:$0x1] %v81
    %s83 = sld [smem:[#allocation3 + $0x7]]
    %s84 = scalar_lea.vmem [#allocation8], %s83
    %v85 = vld [vmem:[%s84] sm:$0x1]
    %86 = vst [vmem:[#allocation2 + $0x7] sm:$0x1] %v85
    %v87 = vld [vmem:[#allocation2] sm:$0xff]
    %v88 = vld [vmem:[#allocation8 + $0x10] sm:$0xff]
    %v89 = vld [vmem:[#allocation8 + $0x18] sm:$0xff]
    %v90 = vld [vmem:[#allocation8 + $0x20] sm:$0xff]
    %v91 = vld [vmem:[#allocation8 + $0x28] sm:$0xff]
    %v92 = vld [vmem:[#allocation8 + $0x30] sm:$0xf]
    %v93 = vld [vmem:[#allocation7] sm:$0xf]
    %v94 = vld [vmem:[#allocation7 + $0x4] sm:$0xf]
    %v95 = vld [vmem:[#allocation7 + $0x8] sm:$0xf]
    %v96 = vld [vmem:[#allocation7 + $0xc] sm:$0xf]
    %v97 = vld [vmem:[#allocation7 + $0x10] sm:$0xf]
    %v98 = vld [vmem:[#allocation7 + $0x14] sm:$0xf]
    %v99 = vld [vmem:[#allocation7 + $0x18] sm:$0xf]
    %v100 = vld [vmem:[#allocation7 + $0x1c] sm:$0xf]
    %v101 = vld [vmem:[#allocation7 + $0x20] sm:$0xf]
    %v102 = vld [vmem:[#allocation7 + $0x24] sm:$0xf]
    %v103 = vld [vmem:[#allocation7 + $0x28] sm:$0xf]
    %v104 = vld [vmem:[#allocation7 + $0x2c] sm:$0xf]
    %v105 = vld [vmem:[#allocation7 + $0x30] sm:$0xf]
    %v106 = vld [vmem:[#allocation7 + $0x34] sm:$0xf]
    %v107 = vld [vmem:[#allocation7 + $0x38] sm:$0xf]
    %v108 = vld [vmem:[#allocation7 + $0x3c] sm:$0xf]
    %v109 = vld [vmem:[#allocation7 + $0x40] sm:$0xf]
    %v110 = vld [vmem:[#allocation7 + $0x44] sm:$0xf]
    %v111 = vld [vmem:[#allocation7 + $0x48] sm:$0xf]
    %v112 = vld [vmem:[#allocation7 + $0x4c] sm:$0xf]
    %v113 = vld [vmem:[#allocation7 + $0x50] sm:$0xf]
    %v114 = vld [vmem:[#allocation7 + $0x54] sm:$0xf]
    %v115 = vld [vmem:[#allocation7 + $0x58] sm:$0xf]
    %v116 = vld [vmem:[#allocation7 + $0x5c] sm:$0xf]
    %v117 = vld [vmem:[#allocation7 + $0x60] sm:$0xf]
    %v118 = vld [vmem:[#allocation7 + $0x64] sm:$0xf]
    %v119 = vld [vmem:[#allocation7 + $0x68] sm:$0xf]
    %v120 = vld [vmem:[#allocation7 + $0x6c] sm:$0xf]
    %v121 = vpack.c.bf16 %v87, %v87
    %v122 = vld [vmem:[#allocation8 + $0x40] sm:$0xff]
    %v127 = vunpack.c.l.b16 %v93
    %v128 = vunpack.c.l.b16 %v94
    %v129 = vunpack.c.l.b16 %v95
    %v130 = vunpack.c.l.b16 %v96
    %v131 = vpack.c.b16 %v128, %v127
    %v132 = vpack.c.b16 %v130, %v129
    %vm135 = vcmask 261120
    %v137 = vsel %vm135, %v121, 0
    %139 = vmatprep.subr.bf16.mxu0 0
    %140 = vmatpush1.bf16.msra.mxu0 0
    %141 = vmatprep.subr.bf16.mxu0 0
    %142 = vmatpush1.bf16.msra.mxu0 0
    %143 = vmatprep.subr.bf16.mxu0 0
    %144 = vmatpush1.bf16.msra.mxu0 0
    %145 = vmatprep.subr.bf16.mxu0 0
    %146 = vmatpush1.bf16.msra.mxu0 0
    %147 = vmatprep.subr.bf16.mxu0 0
    %148 = vmatpush1.bf16.msra.mxu0 0
    %149 = vmatprep.subr.bf16.mxu0 0
    %150 = vmatpush1.bf16.msra.mxu0 0
    %151 = vmatprep.subr.bf16.mxu0 0
    %152 = vmatpush1.bf16.msra.mxu0 %v132
    %153 = vmatprep.subr.bf16.mxu0 0
    %154 = vmatpush1.bf16.msra.mxu0 %v131
    %155 = vmatprep.subr.bf16.mxu0 0
    %156 = vmatpush2.bf16.msra.mxu0 0
    %157 = vmatprep.subr.bf16.mxu0 0
    %158 = vmatpush2.bf16.msra.mxu0 0
    %159 = vmatprep.subr.bf16.mxu0 0
    %160 = vmatpush2.bf16.msra.mxu0 0
    %161 = vmatprep.subr.bf16.mxu0 0
    %162 = vmatpush2.bf16.msra.mxu0 0
    %163 = vmatprep.subr.bf16.mxu0 0
    %164 = vmatpush2.bf16.msra.mxu0 0
    %165 = vmatprep.subr.bf16.mxu0 0
    %166 = vmatpush2.bf16.msra.mxu0 0
    %167 = vmatprep.subr.bf16.mxu0 0
    %168 = vmatpush2.bf16.msra.mxu0 0
    %169 = vmatprep.subr.bf16.mxu0 0
    %170 = vmatpush2.bf16.msra.mxu0 0
    %171 = vmatprep.mubr.bf16.mxu0 0
    %172 = vmatmul.mubr.bf16.gmra.mxu0 %v137
    %v173 = vpop.f32.mrf.mxu0
    %v174 = vadd.f32 %v122, %v173
    %v175 = vpop.f32.mrf.mxu0
    %v176 = vpop.f32.mrf.mxu0
    %v177 = vpop.f32.mrf.mxu0
    %178 = vdwg.mxu0
    %v179 = vmul.f32 %v174, %v88
    %v180 = vmul.f32 %v174, %v89
    %v181 = vmul.f32 %v174, %v90
    %v182 = vmul.f32 %v174, %v91
    %v183 = vpack.c.bf16 %v180, %v179
    %v184 = vpack.c.bf16 %v182, %v181
    %v185 = vpack.c.bf16 %v174, %v174
    %187 = vrot.lane.b32.xlu0 %v185, 96
    %v188 = vpop.permute.xlu0 %187
    %v190 = vsel %vm135, %v183, 0
    %v193 = vsel %vm135, %v184, 0
    %v196 = vsel %vm135, %v188, 0
    %198 = vmatprep.subr.bf16.mxu0 0
    %199 = vmatpush1.bf16.xpose.msra.mxu0 0
    %200 = vmatprep.subr.bf16.mxu0 0
    %201 = vmatpush1.bf16.xpose.msra.mxu0 0
    %202 = vmatprep.subr.bf16.mxu0 0
    %203 = vmatpush1.bf16.xpose.msra.mxu0 0
    %204 = vmatprep.subr.bf16.mxu0 0
    %205 = vmatpush1.bf16.xpose.msra.mxu0 0
    %206 = vmatprep.subr.bf16.mxu0 0
    %207 = vmatpush1.bf16.xpose.msra.mxu0 0
    %208 = vmatprep.subr.bf16.mxu0 0
    %209 = vmatpush1.bf16.xpose.msra.mxu0 0
    %210 = vmatprep.subr.bf16.mxu0 0
    %211 = vmatpush1.bf16.xpose.msra.mxu0 0
    %212 = vmatprep.subr.bf16.mxu0 0
    %213 = vmatpush1.bf16.xpose.msra.mxu0 %v196
    %214 = vmatprep.subr.bf16.mxu0 0
    %215 = vmatpush2.bf16.xpose.msra.mxu0 0
    %216 = vmatprep.subr.bf16.mxu0 0
    %217 = vmatpush2.bf16.xpose.msra.mxu0 0
    %218 = vmatprep.subr.bf16.mxu0 0
    %219 = vmatpush2.bf16.xpose.msra.mxu0 0
    %220 = vmatprep.subr.bf16.mxu0 0
    %221 = vmatpush2.bf16.xpose.msra.mxu0 0
    %222 = vmatprep.subr.bf16.mxu0 0
    %223 = vmatpush2.bf16.xpose.msra.mxu0 0
    %224 = vmatprep.subr.bf16.mxu0 0
    %225 = vmatpush2.bf16.xpose.msra.mxu0 0
    %226 = vmatprep.subr.bf16.mxu0 0
    %227 = vmatpush2.bf16.xpose.msra.mxu0 0
    %228 = vmatprep.subr.bf16.mxu0 0
    %229 = vmatpush2.bf16.xpose.msra.mxu0 0
    %230 = vmatprep.mubr.bf16.mxu0 0
    %231 = vmatmul.mubr.bf16.gmra.mxu0 %v190
    %v232 = vpop.f32.mrf.mxu0
    %v233 = vadd.f32 0.0, %v232
    %v234 = vpop.f32.mrf.mxu0
    %v235 = vpop.f32.mrf.mxu0
    %v236 = vadd.f32 0.0, %v235
    %v237 = vpop.f32.mrf.mxu0
    %238 = vmatprep.mubr.bf16.mxu0 0
    %239 = vmatmul.mubr.bf16.gmra.mxu0 %v193
    %v240 = vpop.f32.mrf.mxu0
    %v241 = vadd.f32 0.0, %v240
    %v242 = vpop.f32.mrf.mxu0
    %v243 = vpop.f32.mrf.mxu0
    %v244 = vadd.f32 0.0, %v243
    %v245 = vpop.f32.mrf.mxu0
    %246 = vdwg.mxu0
    %vm247 = vcmask 64512
    %v248 = vsel %vm247, %v233, -inf
    %249 = vmax.xlane.f32.xlu0 %v248
    %v250 = vpop.xlane.xlu0 %249
    %v251 = vsel %vm247, %v236, -inf
    %252 = vmax.xlane.f32.xlu0 %v251
    %v253 = vpop.xlane.xlu0 %252
    %v254 = vsel %vm247, %v241, -inf
    %255 = vmax.xlane.f32.xlu0 %v254
    %v256 = vpop.xlane.xlu0 %255
    %v257 = vsel %vm247, %v244, -inf
    %258 = vmax.xlane.f32.xlu0 %v257
    %v259 = vpop.xlane.xlu0 %258
    %v260 = vsub.f32 %v233, %v250
    %v261 = vsub.f32 %v236, %v253
    %v262 = vsub.f32 %v241, %v256
    %v263 = vsub.f32 %v244, %v259
    %v264 = vmul.f32 %v260, 1.442695
    %v265 = vpow.pop %v264
    %v266 = vmul.f32 %v261, 1.442695
    %v267 = vpow.pop %v266
    %v268 = vmul.f32 %v262, 1.442695
    %v269 = vpow.pop %v268
    %v270 = vmul.f32 %v263, 1.442695
    %v271 = vpow.pop %v270
    %v272 = vsel %vm247, %v265, 0.0
    %273 = vadd.xlane.f32.xlu0 %v272
    %v274 = vpop.xlane.xlu0 %273
    %v275 = vsel %vm247, %v267, 0.0
    %276 = vadd.xlane.f32.xlu0 %v275
    %v277 = vpop.xlane.xlu0 %276
    %v278 = vsel %vm247, %v269, 0.0
    %279 = vadd.xlane.f32.xlu0 %v278
    %v280 = vpop.xlane.xlu0 %279
    %v281 = vsel %vm247, %v271, 0.0
    %282 = vadd.xlane.f32.xlu0 %v281
    %v283 = vpop.xlane.xlu0 %282
    %v284 = vrcp.pop %v274
    %v285 = vmul.f32 %v265, %v284
    %v286 = vrcp.pop %v277
    %v287 = vmul.f32 %v267, %v286
    %v288 = vrcp.pop %v280
    %v289 = vmul.f32 %v269, %v288
    %v290 = vrcp.pop %v283
    %v291 = vmul.f32 %v271, %v290
    %v292 = vpack.c.bf16 %v287, %v285
    %v293 = vpack.c.bf16 %v291, %v289
    %294 = vrot.lane.b32.xlu0 %v185, 64
    %v295 = vpop.permute.xlu0 %294
    %v297 = vsel %vm247, %v292, 0
    %v300 = vsel %vm247, %v293, 0
    %vm302 = vcmask 1043456
    %v304 = vsel %vm302, %v295, 0
    %306 = vmatprep.subr.bf16.mxu0 0
    %307 = vmatpush1.bf16.msra.mxu0 0
    %308 = vmatprep.subr.bf16.mxu0 0
    %309 = vmatpush1.bf16.msra.mxu0 0
    %310 = vmatprep.subr.bf16.mxu0 0
    %311 = vmatpush1.bf16.msra.mxu0 0
    %312 = vmatprep.subr.bf16.mxu0 0
    %313 = vmatpush1.bf16.msra.mxu0 0
    %314 = vmatprep.subr.bf16.mxu0 0
    %315 = vmatpush1.bf16.msra.mxu0 0
    %316 = vmatprep.subr.bf16.mxu0 0
    %317 = vmatpush1.bf16.msra.mxu0 0
    %318 = vmatprep.subr.bf16.mxu0 0
    %319 = vmatpush1.bf16.msra.mxu0 0
    %320 = vmatprep.subr.bf16.mxu0 0
    %321 = vmatpush1.bf16.msra.mxu0 %v304
    %322 = vmatprep.subr.bf16.mxu0 0
    %323 = vmatpush2.bf16.msra.mxu0 0
    %324 = vmatprep.subr.bf16.mxu0 0
    %325 = vmatpush2.bf16.msra.mxu0 0
    %326 = vmatprep.subr.bf16.mxu0 0
    %327 = vmatpush2.bf16.msra.mxu0 0
    %328 = vmatprep.subr.bf16.mxu0 0
    %329 = vmatpush2.bf16.msra.mxu0 0
    %330 = vmatprep.subr.bf16.mxu0 0
    %331 = vmatpush2.bf16.msra.mxu0 0
    %332 = vmatprep.subr.bf16.mxu0 0
    %333 = vmatpush2.bf16.msra.mxu0 0
    %334 = vmatprep.subr.bf16.mxu0 0
    %335 = vmatpush2.bf16.msra.mxu0 0
    %336 = vmatprep.subr.bf16.mxu0 0
    %337 = vmatpush2.bf16.msra.mxu0 0
    %338 = vmatprep.mubr.bf16.mxu0 0
    %339 = vmatmul.mubr.bf16.gmra.mxu0 %v297
    %v340 = vpop.f32.mrf.mxu0
    %v341 = vadd.f32 0.0, %v340
    %v342 = vpop.f32.mrf.mxu0
    %v343 = vpop.f32.mrf.mxu0
    %v344 = vadd.f32 0.0, %v343
    %v345 = vpop.f32.mrf.mxu0
    %346 = vmatprep.mubr.bf16.mxu0 0
    %347 = vmatmul.mubr.bf16.gmra.mxu0 %v300
    %v348 = vpop.f32.mrf.mxu0
    %v349 = vadd.f32 0.0, %v348
    %v350 = vpop.f32.mrf.mxu0
    %v351 = vpop.f32.mrf.mxu0
    %v352 = vadd.f32 0.0, %v351
    %v353 = vpop.f32.mrf.mxu0
    %354 = vdwg.mxu0
    %v355 = vmul.f32 %v341, %v88
    %v356 = vmul.f32 %v344, %v89
    %v357 = vmul.f32 %v349, %v90
    %v358 = vmul.f32 %v352, %v91
    %v359 = vsel %vm135, %v355, 0.0
    %v360 = vsel %vm135, %v356, 0.0
    %v361 = vadd.f32 %v359, %v360
    %v362 = vsel %vm135, %v357, 0.0
    %v363 = vadd.f32 %v361, %v362
    %v364 = vsel %vm135, %v358, 0.0
    %v365 = vadd.f32 %v363, %v364
    %v366 = vpack.c.bf16 %v365, %v365
    %v371 = vunpack.c.l.b16 %v97
    %v372 = vunpack.c.l.b16 %v98
    %v373 = vunpack.c.l.b16 %v99
    %v374 = vunpack.c.l.b16 %v100
    %v375 = vpack.c.b16 %v372, %v371
    %v376 = vpack.c.b16 %v374, %v373
    %v380 = vsel %vm135, %v366, 0
    %382 = vmatprep.subr.bf16.mxu0 0
    %383 = vmatpush1.bf16.msra.mxu0 0
    %384 = vmatprep.subr.bf16.mxu0 0
    %385 = vmatpush1.bf16.msra.mxu0 0
    %386 = vmatprep.subr.bf16.mxu0 0
    %387 = vmatpush1.bf16.msra.mxu0 0
    %388 = vmatprep.subr.bf16.mxu0 0
    %389 = vmatpush1.bf16.msra.mxu0 0
    %390 = vmatprep.subr.bf16.mxu0 0
    %391 = vmatpush1.bf16.msra.mxu0 0
    %392 = vmatprep.subr.bf16.mxu0 0
    %393 = vmatpush1.bf16.msra.mxu0 0
    %394 = vmatprep.subr.bf16.mxu0 0
    %395 = vmatpush1.bf16.msra.mxu0 %v376
    %396 = vmatprep.subr.bf16.mxu0 0
    %397 = vmatpush1.bf16.msra.mxu0 %v375
    %398 = vmatprep.subr.bf16.mxu0 0
    %399 = vmatpush2.bf16.msra.mxu0 0
    %400 = vmatprep.subr.bf16.mxu0 0
    %401 = vmatpush2.bf16.msra.mxu0 0
    %402 = vmatprep.subr.bf16.mxu0 0
    %403 = vmatpush2.bf16.msra.mxu0 0
    %404 = vmatprep.subr.bf16.mxu0 0
    %405 = vmatpush2.bf16.msra.mxu0 0
    %406 = vmatprep.subr.bf16.mxu0 0
    %407 = vmatpush2.bf16.msra.mxu0 0
    %408 = vmatprep.subr.bf16.mxu0 0
    %409 = vmatpush2.bf16.msra.mxu0 0
    %410 = vmatprep.subr.bf16.mxu0 0
    %411 = vmatpush2.bf16.msra.mxu0 0
    %412 = vmatprep.subr.bf16.mxu0 0
    %413 = vmatpush2.bf16.msra.mxu0 0
    %414 = vmatprep.mubr.bf16.mxu0 0
    %415 = vmatmul.mubr.bf16.gmra.mxu0 %v380
    %v416 = vpop.f32.mrf.mxu0
    %v417 = vadd.f32 0.0, %v416
    %v418 = vpop.f32.mrf.mxu0
    %v419 = vpop.f32.mrf.mxu0
    %v420 = vpop.f32.mrf.mxu0
    %421 = vdwg.mxu0
    %v422 = vld [vmem:[#allocation8 + $0x48] sm:$0xff]
    %v423 = vadd.f32 %v417, %v422
    %v424 = vadd.f32 %v87, %v423
    %v425 = vld [vmem:[#allocation8 + $0x50] sm:$0xff]
    %v426 = vld [vmem:[#allocation8 + $0x58] sm:$0xff]
    %v427 = vsel %vm135, %v424, 0.0
    %428 = vadd.xlane.f32.xlu0 %v427
    %v429 = vpop.xlane.xlu0 %428
    %v430 = vrcp.pop 32.0
    %v431 = vmul.f32 %v429, %v430
    %v432 = vsub.f32 %v424, %v431
    %v433 = vmul.f32 %v432, %v432
    %v434 = vsel %vm135, %v433, 0.0
    %435 = vadd.xlane.f32.xlu0 %v434
    %v436 = vpop.xlane.xlu0 %435
    %v437 = vmul.f32 %v436, %v430
    %v438 = vadd.f32 %v437, 1e-05
    %v439 = vrsqrt.pop %v438
    %v440 = vmul.f32 %v432, %v439
    %v441 = vmul.f32 %v440, %v425
    %v442 = vadd.f32 %v441, %v426
    %v443 = vpack.c.bf16 %v442, %v442
    %v444 = vld [vmem:[#allocation8 + $0x60] sm:$0xff]
    %v449 = vunpack.c.l.b16 %v101
    %v450 = vunpack.c.l.b16 %v102
    %v451 = vunpack.c.l.b16 %v103
    %v452 = vunpack.c.l.b16 %v104
    %v453 = vpack.c.b16 %v450, %v449
    %v454 = vpack.c.b16 %v452, %v451
    %v458 = vsel %vm135, %v443, 0
    %460 = vmatprep.subr.bf16.mxu0 0
    %461 = vmatpush1.bf16.msra.mxu0 0
    %462 = vmatprep.subr.bf16.mxu0 0
    %463 = vmatpush1.bf16.msra.mxu0 0
    %464 = vmatprep.subr.bf16.mxu0 0
    %465 = vmatpush1.bf16.msra.mxu0 0
    %466 = vmatprep.subr.bf16.mxu0 0
    %467 = vmatpush1.bf16.msra.mxu0 0
    %468 = vmatprep.subr.bf16.mxu0 0
    %469 = vmatpush1.bf16.msra.mxu0 0
    %470 = vmatprep.subr.bf16.mxu0 0
    %471 = vmatpush1.bf16.msra.mxu0 0
    %472 = vmatprep.subr.bf16.mxu0 0
    %473 = vmatpush1.bf16.msra.mxu0 %v454
    %474 = vmatprep.subr.bf16.mxu0 0
    %475 = vmatpush1.bf16.msra.mxu0 %v453
    %476 = vmatprep.subr.bf16.mxu0 0
    %477 = vmatpush2.bf16.msra.mxu0 0
    %478 = vmatprep.subr.bf16.mxu0 0
    %479 = vmatpush2.bf16.msra.mxu0 0
    %480 = vmatprep.subr.bf16.mxu0 0
    %481 = vmatpush2.bf16.msra.mxu0 0
    %482 = vmatprep.subr.bf16.mxu0 0
    %483 = vmatpush2.bf16.msra.mxu0 0
    %484 = vmatprep.subr.bf16.mxu0 0
    %485 = vmatpush2.bf16.msra.mxu0 0
    %486 = vmatprep.subr.bf16.mxu0 0
    %487 = vmatpush2.bf16.msra.mxu0 0
    %488 = vmatprep.subr.bf16.mxu0 0
    %489 = vmatpush2.bf16.msra.mxu0 0
    %490 = vmatprep.subr.bf16.mxu0 0
    %491 = vmatpush2.bf16.msra.mxu0 0
    %492 = vmatprep.mubr.bf16.mxu0 0
    %493 = vmatmul.mubr.bf16.gmra.mxu0 %v458
    %v494 = vpop.f32.mrf.mxu0
    %v495 = vadd.f32 %v444, %v494
    %v496 = vpop.f32.mrf.mxu0
    %v497 = vpop.f32.mrf.mxu0
    %v498 = vpop.f32.mrf.mxu0
    %499 = vdwg.mxu0
    %v500 = vmax.f32 %v495, 0.0
    %v501 = vpack.c.bf16 %v500, %v500
    %v518 = vunpack.c.l.b16 %v105
    %v519 = vunpack.c.l.b16 %v106
    %v520 = vunpack.c.l.b16 %v107
    %v521 = vunpack.c.l.b16 %v108
    %v522 = vunpack.c.l.b16 %v109
    %v523 = vunpack.c.l.b16 %v110
    %v524 = vunpack.c.l.b16 %v111
    %v525 = vunpack.c.l.b16 %v112
    %v526 = vunpack.c.l.b16 %v113
    %v527 = vunpack.c.l.b16 %v114
    %v528 = vunpack.c.l.b16 %v115
    %v529 = vunpack.c.l.b16 %v116
    %v530 = vunpack.c.l.b16 %v117
    %v531 = vunpack.c.l.b16 %v118
    %v532 = vunpack.c.l.b16 %v119
    %v533 = vunpack.c.l.b16 %v120
    %v534 = vpack.c.b16 %v519, %v518
    %v535 = vpack.c.b16 %v521, %v520
    %v536 = vpack.c.b16 %v523, %v522
    %v537 = vpack.c.b16 %v525, %v524
    %v538 = vpack.c.b16 %v527, %v526
    %v539 = vpack.c.b16 %v529, %v528
    %v540 = vpack.c.b16 %v531, %v530
    %v541 = vpack.c.b16 %v533, %v532
    %550 = vmatprep.subr.bf16.mxu0 0
    %551 = vmatpush1.bf16.msra.mxu0 %v541
    %552 = vmatprep.subr.bf16.mxu0 0
    %553 = vmatpush1.bf16.msra.mxu0 %v540
    %554 = vmatprep.subr.bf16.mxu0 0
    %555 = vmatpush1.bf16.msra.mxu0 %v539
    %556 = vmatprep.subr.bf16.mxu0 0
    %557 = vmatpush1.bf16.msra.mxu0 %v538
    %558 = vmatprep.subr.bf16.mxu0 0
    %559 = vmatpush1.bf16.msra.mxu0 %v537
    %560 = vmatprep.subr.bf16.mxu0 0
    %561 = vmatpush1.bf16.msra.mxu0 %v536
    %562 = vmatprep.subr.bf16.mxu0 0
    %563 = vmatpush1.bf16.msra.mxu0 %v535
    %564 = vmatprep.subr.bf16.mxu0 0
    %565 = vmatpush1.bf16.msra.mxu0 %v534
    %566 = vmatprep.subr.bf16.mxu0 0
    %567 = vmatpush2.bf16.msra.mxu0 0
    %568 = vmatprep.subr.bf16.mxu0 0
    %569 = vmatpush2.bf16.msra.mxu0 0
    %570 = vmatprep.subr.bf16.mxu0 0
    %571 = vmatpush2.bf16.msra.mxu0 0
    %572 = vmatprep.subr.bf16.mxu0 0
    %573 = vmatpush2.bf16.msra.mxu0 0
    %574 = vmatprep.subr.bf16.mxu0 0
    %575 = vmatpush2.bf16.msra.mxu0 0
    %576 = vmatprep.subr.bf16.mxu0 0
    %577 = vmatpush2.bf16.msra.mxu0 0
    %578 = vmatprep.subr.bf16.mxu0 0
    %579 = vmatpush2.bf16.msra.mxu0 0
    %580 = vmatprep.subr.bf16.mxu0 0
    %581 = vmatpush2.bf16.msra.mxu0 0
    %582 = vmatprep.mubr.bf16.mxu0 0
    %583 = vmatmul.mubr.bf16.gmra.mxu0 %v501
    %v584 = vpop.f32.mrf.mxu0
    %v585 = vadd.f32 0.0, %v584
    %v586 = vpop.f32.mrf.mxu0
    %v587 = vpop.f32.mrf.mxu0
    %v588 = vpop.f32.mrf.mxu0
    %589 = vdwg.mxu0
    %v590 = vld [vmem:[#allocation8 + $0x68] sm:$0xff]
    %v591 = vadd.f32 %v585, %v590
    %v592 = vadd.f32 %v442, %v591
    %v593 = vld [vmem:[#allocation8 + $0x70] sm:$0xff]
    %v594 = vld [vmem:[#allocation8 + $0x78] sm:$0xff]
    %v595 = vsel %vm135, %v592, 0.0
    %596 = vadd.xlane.f32.xlu0 %v595
    %v597 = vpop.xlane.xlu0 %596
    %v598 = vmul.f32 %v597, %v430
    %v599 = vsub.f32 %v592, %v598
    %v600 = vmul.f32 %v599, %v599
    %v601 = vsel %vm135, %v600, 0.0
    %602 = vadd.xlane.f32.xlu0 %v601
    %v603 = vpop.xlane.xlu0 %602
    %v604 = vmul.f32 %v603, %v430
    %v605 = vadd.f32 %v604, 1e-05
    %v606 = vrsqrt.pop %v605
    %v607 = vmul.f32 %v599, %v606
    %v608 = vmul.f32 %v607, %v593
    %v609 = vadd.f32 %v608, %v594
    %s610 = scalar_lea.vmem [#allocation7], 112
    %v611 = vld [vmem:[%s610] sm:$0xf]
    %v612 = vld [vmem:[%s610 + $0x4] sm:$0xf]
    %v613 = vld [vmem:[%s610 + $0x8] sm:$0xf]
    %v614 = vld [vmem:[%s610 + $0xc] sm:$0xf]
    %v615 = vld [vmem:[%s610 + $0x10] sm:$0xf]
    %v616 = vld [vmem:[%s610 + $0x14] sm:$0xf]
    %v617 = vld [vmem:[%s610 + $0x18] sm:$0xf]
    %v618 = vld [vmem:[%s610 + $0x1c] sm:$0xf]
    %v619 = vld [vmem:[%s610 + $0x20] sm:$0xf]
    %v620 = vld [vmem:[%s610 + $0x24] sm:$0xf]
    %v621 = vld [vmem:[%s610 + $0x28] sm:$0xf]
    %v622 = vld [vmem:[%s610 + $0x2c] sm:$0xf]
    %v623 = vld [vmem:[%s610 + $0x30] sm:$0xf]
    %v624 = vld [vmem:[%s610 + $0x34] sm:$0xf]
    %v625 = vld [vmem:[%s610 + $0x38] sm:$0xf]
    %v626 = vld [vmem:[%s610 + $0x3c] sm:$0xf]
    %v627 = vld [vmem:[%s610 + $0x40] sm:$0xf]
    %v628 = vld [vmem:[%s610 + $0x44] sm:$0xf]
    %v629 = vld [vmem:[%s610 + $0x48] sm:$0xf]
    %v630 = vld [vmem:[%s610 + $0x4c] sm:$0xf]
    %v631 = vld [vmem:[%s610 + $0x50] sm:$0xf]
    %v632 = vld [vmem:[%s610 + $0x54] sm:$0xf]
    %v633 = vld [vmem:[%s610 + $0x58] sm:$0xf]
    %v634 = vld [vmem:[%s610 + $0x5c] sm:$0xf]
    %v635 = vld [vmem:[%s610 + $0x60] sm:$0xf]
    %v636 = vld [vmem:[%s610 + $0x64] sm:$0xf]
    %v637 = vld [vmem:[%s610 + $0x68] sm:$0xf]
    %v638 = vld [vmem:[%s610 + $0x6c] sm:$0xf]
    %v639 = vpack.c.bf16 %v609, %v609
    %v640 = vld [vmem:[#allocation8 + $0x80] sm:$0xff]
    %v645 = vunpack.c.l.b16 %v611
    %v646 = vunpack.c.l.b16 %v612
    %v647 = vunpack.c.l.b16 %v613
    %v648 = vunpack.c.l.b16 %v614
    %v649 = vpack.c.b16 %v646, %v645
    %v650 = vpack.c.b16 %v648, %v647
    %v654 = vsel %vm135, %v639, 0
    %656 = vmatprep.subr.bf16.mxu0 0
    %657 = vmatpush1.bf16.msra.mxu0 0
    %658 = vmatprep.subr.bf16.mxu0 0
    %659 = vmatpush1.bf16.msra.mxu0 0
    %660 = vmatprep.subr.bf16.mxu0 0
    %661 = vmatpush1.bf16.msra.mxu0 0
    %662 = vmatprep.subr.bf16.mxu0 0
    %663 = vmatpush1.bf16.msra.mxu0 0
    %664 = vmatprep.subr.bf16.mxu0 0
    %665 = vmatpush1.bf16.msra.mxu0 0
    %666 = vmatprep.subr.bf16.mxu0 0
    %667 = vmatpush1.bf16.msra.mxu0 0
    %668 = vmatprep.subr.bf16.mxu0 0
    %669 = vmatpush1.bf16.msra.mxu0 %v650
    %670 = vmatprep.subr.bf16.mxu0 0
    %671 = vmatpush1.bf16.msra.mxu0 %v649
    %672 = vmatprep.subr.bf16.mxu0 0
    %673 = vmatpush2.bf16.msra.mxu0 0
    %674 = vmatprep.subr.bf16.mxu0 0
    %675 = vmatpush2.bf16.msra.mxu0 0
    %676 = vmatprep.subr.bf16.mxu0 0
    %677 = vmatpush2.bf16.msra.mxu0 0
    %678 = vmatprep.subr.bf16.mxu0 0
    %679 = vmatpush2.bf16.msra.mxu0 0
    %680 = vmatprep.subr.bf16.mxu0 0
    %681 = vmatpush2.bf16.msra.mxu0 0
    %682 = vmatprep.subr.bf16.mxu0 0
    %683 = vmatpush2.bf16.msra.mxu0 0
    %684 = vmatprep.subr.bf16.mxu0 0
    %685 = vmatpush2.bf16.msra.mxu0 0
    %686 = vmatprep.subr.bf16.mxu0 0
    %687 = vmatpush2.bf16.msra.mxu0 0
    %688 = vmatprep.mubr.bf16.mxu0 0
    %689 = vmatmul.mubr.bf16.gmra.mxu0 %v654
    %v690 = vpop.f32.mrf.mxu0
    %v691 = vadd.f32 %v640, %v690
    %v692 = vpop.f32.mrf.mxu0
    %v693 = vpop.f32.mrf.mxu0
    %v694 = vpop.f32.mrf.mxu0
    %695 = vdwg.mxu0
    %v696 = vlaneseq
    %v697 = vshrl.u32 %v696, 7
    %v698 = vsub.s32 7, %v697
    %v699 = vrot.slane %v691, %v698
    %v700 = vmul.f32 %v699, %v92
    %v701 = vpack.c.bf16 %v700, %v700
    %v702 = vpack.c.bf16 %v691, %v691
    %704 = vrot.lane.b32.xlu0 %v702, 96
    %v705 = vpop.permute.xlu0 %704
    %v707 = vsel %vm135, %v701, 0
    %v710 = vsel %vm135, %v705, 0
    %712 = vmatprep.subr.bf16.mxu0 0
    %713 = vmatpush1.bf16.xpose.msra.mxu0 0
    %714 = vmatprep.subr.bf16.mxu0 0
    %715 = vmatpush1.bf16.xpose.msra.mxu0 0
    %716 = vmatprep.subr.bf16.mxu0 0
    %717 = vmatpush1.bf16.xpose.msra.mxu0 0
    %718 = vmatprep.subr.bf16.mxu0 0
    %719 = vmatpush1.bf16.xpose.msra.mxu0 0
    %720 = vmatprep.subr.bf16.mxu0 0
    %721 = vmatpush1.bf16.xpose.msra.mxu0 0
    %722 = vmatprep.subr.bf16.mxu0 0
    %723 = vmatpush1.bf16.xpose.msra.mxu0 0
    %724 = vmatprep.subr.bf16.mxu0 0
    %725 = vmatpush1.bf16.xpose.msra.mxu0 0
    %726 = vmatprep.subr.bf16.mxu0 0
    %727 = vmatpush1.bf16.xpose.msra.mxu0 %v710
    %728 = vmatprep.subr.bf16.mxu0 0
    %729 = vmatpush2.bf16.xpose.msra.mxu0 0
    %730 = vmatprep.subr.bf16.mxu0 0
    %731 = vmatpush2.bf16.xpose.msra.mxu0 0
    %732 = vmatprep.subr.bf16.mxu0 0
    %733 = vmatpush2.bf16.xpose.msra.mxu0 0
    %734 = vmatprep.subr.bf16.mxu0 0
    %735 = vmatpush2.bf16.xpose.msra.mxu0 0
    %736 = vmatprep.subr.bf16.mxu0 0
    %737 = vmatpush2.bf16.xpose.msra.mxu0 0
    %738 = vmatprep.subr.bf16.mxu0 0
    %739 = vmatpush2.bf16.xpose.msra.mxu0 0
    %740 = vmatprep.subr.bf16.mxu0 0
    %741 = vmatpush2.bf16.xpose.msra.mxu0 0
    %742 = vmatprep.subr.bf16.mxu0 0
    %743 = vmatpush2.bf16.xpose.msra.mxu0 0
    %744 = vmatprep.mubr.bf16.mxu0 0
    %745 = vmatmul.mubr.bf16.gmra.mxu0 %v707
    %v746 = vpop.f32.mrf.mxu0
    %v747 = vadd.f32 0.0, %v746
    %v748 = vpop.f32.mrf.mxu0
    %v749 = vpop.f32.mrf.mxu0
    %v750 = vpop.f32.mrf.mxu0
    %751 = vdwg.mxu0
    %vm752 = vcmask 60416
    %v753 = vsel %vm752, %v747, -inf
    %754 = vmax.xlane.f32.xlu0 %v753
    %v755 = vpop.xlane.xlu0 %754
    %v756 = vsub.f32 %v747, %v755
    %v757 = vmul.f32 %v756, 1.442695
    %v758 = vpow.pop %v757
    %v759 = vsel %vm752, %v758, 0.0
    %760 = vadd.xlane.f32.xlu0 %v759
    %v761 = vpop.xlane.xlu0 %760
    %v762 = vrcp.pop %v761
    %v763 = vmul.f32 %v758, %v762
    %v764 = vpack.c.bf16 %v763, %v763
    %765 = vrot.lane.b32.xlu0 %v702, 64
    %v766 = vpop.permute.xlu0 %765
    %v768 = vsel %vm247, %v764, 0
    %v771 = vsel %vm302, %v766, 0
    %773 = vmatprep.subr.bf16.mxu0 0
    %774 = vmatpush1.bf16.msra.mxu0 0
    %775 = vmatprep.subr.bf16.mxu0 0
    %776 = vmatpush1.bf16.msra.mxu0 0
    %777 = vmatprep.subr.bf16.mxu0 0
    %778 = vmatpush1.bf16.msra.mxu0 0
    %779 = vmatprep.subr.bf16.mxu0 0
    %780 = vmatpush1.bf16.msra.mxu0 0
    %781 = vmatprep.subr.bf16.mxu0 0
    %782 = vmatpush1.bf16.msra.mxu0 0
    %783 = vmatprep.subr.bf16.mxu0 0
    %784 = vmatpush1.bf16.msra.mxu0 0
    %785 = vmatprep.subr.bf16.mxu0 0
    %786 = vmatpush1.bf16.msra.mxu0 0
    %787 = vmatprep.subr.bf16.mxu0 0
    %788 = vmatpush1.bf16.msra.mxu0 %v771
    %789 = vmatprep.subr.bf16.mxu0 0
    %790 = vmatpush2.bf16.msra.mxu0 0
    %791 = vmatprep.subr.bf16.mxu0 0
    %792 = vmatpush2.bf16.msra.mxu0 0
    %793 = vmatprep.subr.bf16.mxu0 0
    %794 = vmatpush2.bf16.msra.mxu0 0
    %795 = vmatprep.subr.bf16.mxu0 0
    %796 = vmatpush2.bf16.msra.mxu0 0
    %797 = vmatprep.subr.bf16.mxu0 0
    %798 = vmatpush2.bf16.msra.mxu0 0
    %799 = vmatprep.subr.bf16.mxu0 0
    %800 = vmatpush2.bf16.msra.mxu0 0
    %801 = vmatprep.subr.bf16.mxu0 0
    %802 = vmatpush2.bf16.msra.mxu0 0
    %803 = vmatprep.subr.bf16.mxu0 0
    %804 = vmatpush2.bf16.msra.mxu0 0
    %805 = vmatprep.mubr.bf16.mxu0 0
    %806 = vmatmul.mubr.bf16.gmra.mxu0 %v768
    %v807 = vpop.f32.mrf.mxu0
    %v808 = vadd.f32 0.0, %v807
    %v809 = vpop.f32.mrf.mxu0
    %v810 = vpop.f32.mrf.mxu0
    %v811 = vpop.f32.mrf.mxu0
    %812 = vdwg.mxu0
    %v813 = vmul.f32 %v808, %v92
    %vm814 = vcmask 257024
    %v815 = vsel %vm814, %v813, 0.0
    %v816 = vrot.slane %v815, 4
    %v817 = vadd.f32 %v815, %v816
    %v818 = vrot.slane %v817, 2
    %v819 = vadd.f32 %v817, %v818
    %v820 = vrot.slane %v819, 1
    %v821 = vadd.f32 %v819, %v820
    %v822 = vpack.c.bf16 %v821, %v821
    %v827 = vunpack.c.l.b16 %v615
    %v828 = vunpack.c.l.b16 %v616
    %v829 = vunpack.c.l.b16 %v617
    %v830 = vunpack.c.l.b16 %v618
    %v831 = vpack.c.b16 %v828, %v827
    %v832 = vpack.c.b16 %v830, %v829
    %v836 = vsel %vm135, %v822, 0
    %838 = vmatprep.subr.bf16.mxu0 0
    %839 = vmatpush1.bf16.msra.mxu0 0
    %840 = vmatprep.subr.bf16.mxu0 0
    %841 = vmatpush1.bf16.msra.mxu0 0
    %842 = vmatprep.subr.bf16.mxu0 0
    %843 = vmatpush1.bf16.msra.mxu0 0
    %844 = vmatprep.subr.bf16.mxu0 0
    %845 = vmatpush1.bf16.msra.mxu0 0
    %846 = vmatprep.subr.bf16.mxu0 0
    %847 = vmatpush1.bf16.msra.mxu0 0
    %848 = vmatprep.subr.bf16.mxu0 0
    %849 = vmatpush1.bf16.msra.mxu0 0
    %850 = vmatprep.subr.bf16.mxu0 0
    %851 = vmatpush1.bf16.msra.mxu0 %v832
    %852 = vmatprep.subr.bf16.mxu0 0
    %853 = vmatpush1.bf16.msra.mxu0 %v831
    %854 = vmatprep.subr.bf16.mxu0 0
    %855 = vmatpush2.bf16.msra.mxu0 0
    %856 = vmatprep.subr.bf16.mxu0 0
    %857 = vmatpush2.bf16.msra.mxu0 0
    %858 = vmatprep.subr.bf16.mxu0 0
    %859 = vmatpush2.bf16.msra.mxu0 0
    %860 = vmatprep.subr.bf16.mxu0 0
    %861 = vmatpush2.bf16.msra.mxu0 0
    %862 = vmatprep.subr.bf16.mxu0 0
    %863 = vmatpush2.bf16.msra.mxu0 0
    %864 = vmatprep.subr.bf16.mxu0 0
    %865 = vmatpush2.bf16.msra.mxu0 0
    %866 = vmatprep.subr.bf16.mxu0 0
    %867 = vmatpush2.bf16.msra.mxu0 0
    %868 = vmatprep.subr.bf16.mxu0 0
    %869 = vmatpush2.bf16.msra.mxu0 0
    %870 = vmatprep.mubr.bf16.mxu0 0
    %871 = vmatmul.mubr.bf16.gmra.mxu0 %v836
    %v872 = vpop.f32.mrf.mxu0
    %v873 = vadd.f32 0.0, %v872
    %v874 = vpop.f32.mrf.mxu0
    %v875 = vpop.f32.mrf.mxu0
    %v876 = vpop.f32.mrf.mxu0
    %877 = vdwg.mxu0
    %v878 = vld [vmem:[#allocation8 + $0x88] sm:$0x1]
    %v879 = vadd.f32 %v873, %v878
    %v881 = vrot.slane %v879, 1
    %v883 = vadd.f32 %v609, %v881
    %v884 = vld [vmem:[#allocation8 + $0x90] sm:$0x1]
    %v885 = vld [vmem:[#allocation8 + $0x98] sm:$0x1]
    %vm886 = vcmask 261127
    %v887 = vsel %vm886, %v883, 0.0
    %888 = vadd.xlane.f32.xlu0 %v887
    %v889 = vpop.xlane.xlu0 %888
    %v890 = vmul.f32 %v889, %v430
    %v891 = vsub.f32 %v883, %v890
    %v892 = vmul.f32 %v891, %v891
    %v893 = vsel %vm886, %v892, 0.0
    %894 = vadd.xlane.f32.xlu0 %v893
    %v895 = vpop.xlane.xlu0 %894
    %v896 = vmul.f32 %v895, %v430
    %v897 = vadd.f32 %v896, 1e-05
    %v898 = vrsqrt.pop %v897
    %v899 = vmul.f32 %v891, %v898
    %v901 = vrot.slane %v884, 1
    %v903 = vmul.f32 %v899, %v901
    %v905 = vrot.slane %v885, 1
    %v907 = vadd.f32 %v903, %v905
    %v908 = vpack.c.bf16 %v907, %v907
    %v909 = vld [vmem:[#allocation8 + $0xa0] sm:$0x1]
    %v911 = vshrl.u32 %v908, 16
    %v913 = vrot.slane %v911, 3
    %v918 = vunpack.c.l.b16 %v619
    %v919 = vunpack.c.l.b16 %v620
    %v920 = vunpack.c.l.b16 %v621
    %v921 = vunpack.c.l.b16 %v622
    %v922 = vpack.c.b16 %v919, %v918
    %v923 = vpack.c.b16 %v921, %v920
    %v927 = vsel %vm135, %v913, 0
    %929 = vmatprep.subr.bf16.mxu0 0
    %930 = vmatpush1.bf16.msra.mxu0 0
    %931 = vmatprep.subr.bf16.mxu0 0
    %932 = vmatpush1.bf16.msra.mxu0 0
    %933 = vmatprep.subr.bf16.mxu0 0
    %934 = vmatpush1.bf16.msra.mxu0 0
    %935 = vmatprep.subr.bf16.mxu0 0
    %936 = vmatpush1.bf16.msra.mxu0 0
    %937 = vmatprep.subr.bf16.mxu0 0
    %938 = vmatpush1.bf16.msra.mxu0 0
    %939 = vmatprep.subr.bf16.mxu0 0
    %940 = vmatpush1.bf16.msra.mxu0 0
    %941 = vmatprep.subr.bf16.mxu0 0
    %942 = vmatpush1.bf16.msra.mxu0 %v923
    %943 = vmatprep.subr.bf16.mxu0 0
    %944 = vmatpush1.bf16.msra.mxu0 %v922
    %945 = vmatprep.subr.bf16.mxu0 0
    %946 = vmatpush2.bf16.msra.mxu0 0
    %947 = vmatprep.subr.bf16.mxu0 0
    %948 = vmatpush2.bf16.msra.mxu0 0
    %949 = vmatprep.subr.bf16.mxu0 0
    %950 = vmatpush2.bf16.msra.mxu0 0
    %951 = vmatprep.subr.bf16.mxu0 0
    %952 = vmatpush2.bf16.msra.mxu0 0
    %953 = vmatprep.subr.bf16.mxu0 0
    %954 = vmatpush2.bf16.msra.mxu0 0
    %955 = vmatprep.subr.bf16.mxu0 0
    %956 = vmatpush2.bf16.msra.mxu0 0
    %957 = vmatprep.subr.bf16.mxu0 0
    %958 = vmatpush2.bf16.msra.mxu0 0
    %959 = vmatprep.subr.bf16.mxu0 0
    %960 = vmatpush2.bf16.msra.mxu0 0
    %961 = vmatprep.mubr.bf16.mxu0 0
    %962 = vmatmul.mubr.bf16.gmra.mxu0 %v927
    %v963 = vpop.f32.mrf.mxu0
    %v964 = vadd.f32 %v909, %v963
    %v965 = vpop.f32.mrf.mxu0
    %v966 = vpop.f32.mrf.mxu0
    %v967 = vpop.f32.mrf.mxu0
    %968 = vdwg.mxu0
    %v969 = vmax.f32 %v964, 0.0
    %v970 = vpack.c.bf16 %v969, %v969
    %v987 = vunpack.c.l.b16 %v623
    %v988 = vunpack.c.l.b16 %v624
    %v989 = vunpack.c.l.b16 %v625
    %v990 = vunpack.c.l.b16 %v626
    %v991 = vunpack.c.l.b16 %v627
    %v992 = vunpack.c.l.b16 %v628
    %v993 = vunpack.c.l.b16 %v629
    %v994 = vunpack.c.l.b16 %v630
    %v995 = vunpack.c.l.b16 %v631
    %v996 = vunpack.c.l.b16 %v632
    %v997 = vunpack.c.l.b16 %v633
    %v998 = vunpack.c.l.b16 %v634
    %v999 = vunpack.c.l.b16 %v635
    %v1000 = vunpack.c.l.b16 %v636
    %v1001 = vunpack.c.l.b16 %v637
    %v1002 = vunpack.c.l.b16 %v638
    %v1003 = vpack.c.b16 %v988, %v987
    %v1004 = vpack.c.b16 %v990, %v989
    %v1005 = vpack.c.b16 %v992, %v991
    %v1006 = vpack.c.b16 %v994, %v993
    %v1007 = vpack.c.b16 %v996, %v995
    %v1008 = vpack.c.b16 %v998, %v997
    %v1009 = vpack.c.b16 %v1000, %v999
    %v1010 = vpack.c.b16 %v1002, %v1001
    %1019 = vmatprep.subr.bf16.mxu0 0
    %1020 = vmatpush1.bf16.msra.mxu0 %v1010
    %1021 = vmatprep.subr.bf16.mxu0 0
    %1022 = vmatpush1.bf16.msra.mxu0 %v1009
    %1023 = vmatprep.subr.bf16.mxu0 0
    %1024 = vmatpush1.bf16.msra.mxu0 %v1008
    %1025 = vmatprep.subr.bf16.mxu0 0
    %1026 = vmatpush1.bf16.msra.mxu0 %v1007
    %1027 = vmatprep.subr.bf16.mxu0 0
    %1028 = vmatpush1.bf16.msra.mxu0 %v1006
    %1029 = vmatprep.subr.bf16.mxu0 0
    %1030 = vmatpush1.bf16.msra.mxu0 %v1005
    %1031 = vmatprep.subr.bf16.mxu0 0
    %1032 = vmatpush1.bf16.msra.mxu0 %v1004
    %1033 = vmatprep.subr.bf16.mxu0 0
    %1034 = vmatpush1.bf16.msra.mxu0 %v1003
    %1035 = vmatprep.subr.bf16.mxu0 0
    %1036 = vmatpush2.bf16.msra.mxu0 0
    %1037 = vmatprep.subr.bf16.mxu0 0
    %1038 = vmatpush2.bf16.msra.mxu0 0
    %1039 = vmatprep.subr.bf16.mxu0 0
    %1040 = vmatpush2.bf16.msra.mxu0 0
    %1041 = vmatprep.subr.bf16.mxu0 0
    %1042 = vmatpush2.bf16.msra.mxu0 0
    %1043 = vmatprep.subr.bf16.mxu0 0
    %1044 = vmatpush2.bf16.msra.mxu0 0
    %1045 = vmatprep.subr.bf16.mxu0 0
    %1046 = vmatpush2.bf16.msra.mxu0 0
    %1047 = vmatprep.subr.bf16.mxu0 0
    %1048 = vmatpush2.bf16.msra.mxu0 0
    %1049 = vmatprep.subr.bf16.mxu0 0
    %1050 = vmatpush2.bf16.msra.mxu0 0
    %1051 = vmatprep.mubr.bf16.mxu0 0
    %1052 = vmatmul.mubr.bf16.gmra.mxu0 %v970
    %v1053 = vpop.f32.mrf.mxu0
    %v1054 = vadd.f32 0.0, %v1053
    %v1055 = vpop.f32.mrf.mxu0
    %v1056 = vpop.f32.mrf.mxu0
    %v1057 = vpop.f32.mrf.mxu0
    %1058 = vdwg.mxu0
    %v1059 = vld [vmem:[#allocation8 + $0xa8] sm:$0x1]
    %v1060 = vadd.f32 %v1054, %v1059
    %v1062 = vrot.slane %v1060, 1
    %v1064 = vadd.f32 %v907, %v1062
    %v1065 = vld [vmem:[#allocation8 + $0xb0] sm:$0x1]
    %v1066 = vld [vmem:[#allocation8 + $0xb8] sm:$0x1]
    %v1067 = vsel %vm886, %v1064, 0.0
    %1068 = vadd.xlane.f32.xlu0 %v1067
    %v1069 = vpop.xlane.xlu0 %1068
    %v1070 = vmul.f32 %v1069, %v430
    %v1071 = vsub.f32 %v1064, %v1070
    %v1072 = vmul.f32 %v1071, %v1071
    %v1073 = vsel %vm886, %v1072, 0.0
    %1074 = vadd.xlane.f32.xlu0 %v1073
    %v1075 = vpop.xlane.xlu0 %1074
    %v1076 = vmul.f32 %v1075, %v430
    %v1077 = vadd.f32 %v1076, 1e-05
    %v1078 = vrsqrt.pop %v1077
    %v1079 = vmul.f32 %v1071, %v1078
    %v1081 = vrot.slane %v1065, 1
    %v1083 = vmul.f32 %v1079, %v1081
    %v1085 = vrot.slane %v1066, 1
    %v1087 = vadd.f32 %v1083, %v1085
    %v1088 = vld [vmem:[#allocation8 + $0x38] sm:$0x1]
    %v1090 = vrot.slane %v1088, 1
    %v1092 = vmul.f32 %v1087, %v1090
    %v1093 = vsel %vm886, %v1092, 0.0
    %1094 = vadd.xlane.f32.xlu0 %v1093
    %v1095 = vpop.xlane.xlu0 %1094
    %1096 = vrot.lane.b32.xlu0 %v1090, 96
    %v1097 = vpop.permute.xlu0 %1096
    %v1099 = vadd.f32 %v1095, %v1097
    %vm1100 = vcmask 7175
    %1101 = vst.msk [vmem:[#allocation10 - $0x7] sm:$0x80] %vm1100, %v1099
    // Predicated region
    $region26: #{tpu_custom_call.1} parent=1 // pred_check
      _
    $region27: #{tpu_custom_call.1} parent=1 // pred_check_branch
      %1103 = sbr.rel (0) target = $region29
    $region28: #{tpu_custom_call.1} parent=1 // pred_region
      %s1105 = ssub.s32 16, 16
      %1106 = vsyncadd [#allocation5], %s1105
      %s1108 = sshll.u32 [#allocation10], 4
      %s1109 = int_to_ptr.vmem [resolvable:$true] %s1108
      %1111 = dma.vmem_to_hbm [thread:$0]  %s1109, 16, %s3, [#allocation5]
    $region29: #{tpu_custom_call.1} parent=1 // pred_fallthru
      _
    // Predicated region
    $region30: #{tpu_custom_call.1} parent=1 // pred_check
      _
    $region31: #{tpu_custom_call.1} parent=1 // pred_check_branch
      %1113 = sbr.rel (0) target = $region33
    $region32: #{tpu_custom_call.1} parent=1 // pred_region
      %1114 = dma.done [#allocation5], 16
    $region33: #{tpu_custom_call.1} parent=1 // pred_fallthru
      _
    %1115 = vsyncpa [#allocation4], 1
    %1116 = vsyncpa [#allocation9], 1
    %1117 = vsyncpa [#allocation5], 1
    %1118 = vsyncpa [#allocation6], 1

</llo_original>
